<compile_context>
chip_gen: v7x
topology: tpu7x:2x2x1
jax: 0.10.0
libtpu: 0.0.40
codegen_flags: <defaults>
</compile_context>

<pallas_src>
import functools

import numpy as np
import jax
import jax.numpy as jnp
from jax import lax
from jax.experimental import pallas as pl
from jax.experimental.pallas import tpu as pltpu

TEMPERATURE = 0.3
NORM_EPS = 1e-12   # F.normalize eps
COS_EPS = 1e-8     # F.cosine_similarity eps
_HIGHEST = jax.lax.Precision.HIGHEST


def _round_up(x, m):
    return (x + m - 1) // m * m


def _bilinear_matrix(out_size, in_size):
    """(out_size, in_size) matrix reproducing torch F.interpolate
    (mode='bilinear', align_corners=False) along one axis."""
    if out_size == in_size:
        return np.eye(out_size, dtype=np.float32)
    scale = in_size / out_size
    dst = np.arange(out_size, dtype=np.float64)
    src = np.maximum((dst + 0.5) * scale - 0.5, 0.0)
    i0 = np.minimum(np.floor(src).astype(np.int64), in_size - 1)
    i1 = np.minimum(i0 + 1, in_size - 1)
    w1 = src - i0
    w0 = 1.0 - w1
    mat = np.zeros((out_size, in_size), dtype=np.float32)
    rows = np.arange(out_size)
    np.add.at(mat, (rows, i0), w0)
    np.add.at(mat, (rows, i1), w1)
    return mat


def _vmem_limit_bytes():
    cap = 64 * 1024 * 1024
    try:
        info = pltpu.get_tpu_info()
        cap = int(getattr(info, "vmem_capacity_bytes", cap) or cap)
    except Exception:
        pass
    # headroom below physical VMEM (128 MiB on v5e/v6e, 64 MiB on v7x)
    return min(int(cap * 0.85), 112 * 1024 * 1024)


def _select_tiles(b, c, h, w, itemsize, budget):
    """Pick (c_tile, h_tile) for the fused pooled kernel from a VMEM budget."""
    w_lanes = _round_up(w, 128)              # minor dim is lane-padded in VMEM

    def cost(c_t, h_t):
        h_sub = _round_up(h_t, 8)            # second-minor dim is sublane-padded
        emb_blk = b * c_t * h_sub * w_lanes * itemsize      # one pipeline buffer
        f32_tmp = 2 * b * c_t * h_sub * w_lanes * 4          # e / en working copies
        acc = (b * c_t * w_lanes + b * w_lanes) * 4          # VMEM accumulators
        return 2 * emb_blk + f32_tmp + acc                   # double-buffered input

    divisors = sorted({d for d in range(1, c + 1) if c % d == 0}, reverse=True)
    # Prefer >= 2 C-tiles (feeds the 'parallel' megacore axis on v7x) as long as
    # tiles stay reasonably large; other divisors only as budget fallback.
    preferred = [d for d in divisors if d < c and d * 8 >= c]
    candidates = preferred + [d for d in divisors if d not in preferred]

    for c_t in candidates:
        if cost(c_t, h) <= budget:           # whole H in one block: no reduce steps
            return c_t, h
        h_t = _round_up(h, 8)
        while h_t > 8 and cost(c_t, h_t) > budget:
            h_t = max(8, ((h_t // 2) // 8) * 8)
        if cost(c_t, h_t) <= budget:
            return c_t, min(h_t, h)
    return 1, min(8, h)


# ---------------------------------------------------------------------------
# Kernel 1 (dominant): fused mask-interp + batch-dim L2-norm + masked mean.
# Grid = (C tiles [parallel], H tiles [arbitrary, reduction axis last]).
# ---------------------------------------------------------------------------
def _fused_pool_kernel(emb_ref, mask_ref, wh_ref, wwt_ref, out_ref,
                       acc_ref, msum_ref, *, h_total, h_tile, mask_tail, norm_eps):
    hi = pl.program_id(1)
    nh = pl.num_programs(1)

    @pl.when(hi == 0)
    def _():
        acc_ref[...] = jnp.zeros_like(acc_ref)
        msum_ref[...] = jnp.zeros_like(msum_ref)

    e = emb_ref[...].astype(jnp.float32)                  # (B, c_t, h_t, W)
    if mask_tail:
        # Last H tile reads past H: zero those rows so OOB garbage cannot leak.
        row = lax.broadcasted_iota(jnp.int32, (h_tile, e.shape[-1]), 0)
        valid = (row + hi * h_tile) < h_total             # (h_t, W)
        e = jnp.where(valid[None, None], e, 0.0)

    # F.normalize(dim=0): L2 norm over the batch axis, per (c, h, w).
    # rsqrt(max(ssq, eps^2)) == 1 / max(||e||, eps)  -> EUP, no full-width divide.
    ssq = jnp.sum(e * e, axis=0, keepdims=True)
    en = e * lax.rsqrt(jnp.maximum(ssq, norm_eps * norm_eps))

    # Bilinear mask interpolation for the current H rows, computed on the fly:
    #   m_tile[b] = Wh[rows] @ mask[b] @ Ww^T   (mask + weights stay VMEM-resident)
    wh = wh_ref[...].astype(jnp.float32)                  # (h_t, Hm)
    wwt = wwt_ref[...].astype(jnp.float32)                # (Wm, W)
    for b in range(e.shape[0]):                           # B is small & static
        mb = mask_ref[b].astype(jnp.float32)              # (Hm, Wm)
        t = jnp.dot(wh, mb, preferred_element_type=jnp.float32,
                    precision=_HIGHEST)                   # (h_t, Wm)
        m_tile = jnp.dot(t, wwt, preferred_element_type=jnp.float32,
                         precision=_HIGHEST)              # (h_t, W)
        # Fold the H rows now; keep the W lanes -> cross-lane reduce deferred.
        acc_ref[b] += jnp.sum(en[b] * m_tile[None], axis=1)        # (c_t, W)
        msum_ref[b] += jnp.sum(m_tile, axis=0, keepdims=True)      # (1, W)

    @pl.when(hi == nh - 1)
    def _():
        msum = jnp.sum(msum_ref[...], axis=-1)            # (B, 1)
        out_ref[0] = jnp.sum(acc_ref[...], axis=-1) / msum  # (B, c_t), written once


def _pooled_embed(emb, mask):
    """norm_embed(dim=0) + bilinear-resized-mask-weighted spatial mean -> (B, C)."""
    b, c, h, w = emb.shape
    hm, wm = mask.shape[-2:]
    # TODO(synk): only mask channel 0 is used (the reference module broadcasts a
    # single-channel mask over the embedding channels).
    mask3 = mask[:, 0]                                    # (B, Hm, Wm)

    vmem_limit = _vmem_limit_bytes()
    c_t, h_t = _select_tiles(b, c, h, w, emb.dtype.itemsize, vmem_limit // 2)
    h_t = min(h_t, h)
    nc = c // c_t
    nh = pl.cdiv(h, h_t)
    mask_tail = (nh * h_t != h)

    wh_np = _bilinear_matrix(h, hm)                       # (H, Hm)
    if mask_tail:
        wh_np = np.pad(wh_np, ((0, nh * h_t - h), (0, 0)))   # zero rows past H
    wh = jnp.asarray(wh_np)
    wwt = jnp.asarray(_bilinear_matrix(w, wm).T)          # (Wm, W)

    kernel = functools.partial(_fused_pool_kernel, h_total=h, h_tile=h_t,
                               mask_tail=mask_tail, norm_eps=NORM_EPS)
    out = pl.pallas_call(
        kernel,
        out_shape=jax.ShapeDtypeStruct((nc, b, c_t), jnp.float32),
        grid_spec=pltpu.PrefetchScalarGridSpec(
            num_scalar_prefetch=0,
            grid=(nc, nh),
            in_specs=[
                pl.BlockSpec((b, c_t, h_t, w), lambda ci, hi: (0, ci, hi, 0)),
                pl.BlockSpec((b, hm, wm), lambda ci, hi: (0, 0, 0)),
                pl.BlockSpec((h_t, hm), lambda ci, hi: (hi, 0)),
                pl.BlockSpec((wm, w), lambda ci, hi: (0, 0)),
            ],
            out_specs=pl.BlockSpec((1, b, c_t), lambda ci, hi: (ci, 0, 0)),
            scratch_shapes=[
                pltpu.VMEM((b, c_t, w), jnp.float32),     # lane-shaped accumulator
                pltpu.VMEM((b, 1, w), jnp.float32),       # mask-sum accumulator
            ],
        ),
        compiler_params=pltpu.CompilerParams(
            dimension_semantics=("parallel", "arbitrary"),
            vmem_limit_bytes=vmem_limit,
        ),
    )(emb, mask3, wh, wwt)
    # (nc, B, c_t) -> (B, C); tiny array, negligible host-side plumbing.
    return out.transpose(1, 0, 2).reshape(b, c)


# ---------------------------------------------------------------------------
# Kernel 2 (tiny): cosine-similarity matrix / temperature and the loss.
# ---------------------------------------------------------------------------
def _loss_kernel(px_ref, py_ref, out_ref, *, temperature, eps):
    x = px_ref[...].astype(jnp.float32)      # (B, C)
    y = py_ref[...].astype(jnp.float32)      # (B, C)
    xn = x * lax.rsqrt(jnp.maximum(jnp.sum(x * x, axis=1, keepdims=True), eps * eps))
    yn = y * lax.rsqrt(jnp.maximum(jnp.sum(y * y, axis=1, keepdims=True), eps * eps))
    sim = lax.dot_general(xn, yn, (((1,), (1,)), ((), ())),
                          preferred_element_type=jnp.float32,
                          precision=_HIGHEST) / temperature          # (B, B)
    n = sim.shape[0]
    eye = (lax.broadcasted_iota(jnp.int32, (n, n), 0) ==
           lax.broadcasted_iota(jnp.int32, (n, n), 1))
    # Max-subtraction leaves the pos/all ratio unchanged but guards exp overflow.
    m = jnp.max(jnp.max(sim, axis=1, keepdims=True), axis=0, keepdims=True)
    es = jnp.exp(sim - m)
    s_pos = jnp.sum(jnp.sum(jnp.where(eye, es, 0.0), axis=1, keepdims=True),
                    axis=0, keepdims=True)
    s_all = jnp.sum(jnp.sum(es, axis=1, keepdims=True), axis=0, keepdims=True)
    out_ref[...] = -jnp.log(s_pos / s_all)


def _contra_from_pooled(px, py, temperature):
    kernel = functools.partial(_loss_kernel, temperature=float(temperature),
                               eps=COS_EPS)
    out = pl.pallas_call(
        kernel,
        out_shape=jax.ShapeDtypeStruct((1, 1), jnp.float32),
    )(px, py)
    return out[0, 0]


def contra_loss(embedd_x, embedd_y, mask_x, mask_y, temperature=TEMPERATURE):
    """Pallas implementation of ContraLoss.forward (returns a scalar f32)."""
    px = _pooled_embed(embedd_x, mask_x)      # (B, C)
    py = _pooled_embed(embedd_y, mask_y)      # (B, C)
    return _contra_from_pooled(px, py, temperature)


# ---------------------------------------------------------------------------
# Pure-JAX reference (mirrors the PyTorch module).
# ---------------------------------------------------------------------------
def contra_loss_ref(embedd_x, embedd_y, mask_x, mask_y, temperature=TEMPERATURE):
    def norm_embed(e):
        n = jnp.sqrt(jnp.sum(e * e, axis=0, keepdims=True))
        return e / jnp.maximum(n, NORM_EPS)

    def interp(m, out_h, out_w):
        hm, wm = m.shape[-2:]
        wh = jnp.asarray(_bilinear_matrix(out_h, hm))
        ww = jnp.asarray(_bilinear_matrix(out_w, wm))
        return jnp.einsum("hm,bcmn,wn->bchw", wh, m.astype(jnp.float32), ww,
                          precision=_HIGHEST)

    ex = embedd_x.astype(jnp.float32)
    ey = embedd_y.astype(jnp.float32)
    h, w = ex.shape[-2:]
    xm = interp(mask_x, h, w)
    ym = interp(mask_y, h, w)
    sum_x = xm.sum(axis=(-1, -2))
    sum_y = ym.sum(axis=(-1, -2))
    fx = (norm_embed(ex) * xm).sum(axis=(-1, -2)) / sum_x
    fy = (norm_embed(ey) * ym).sum(axis=(-1, -2)) / sum_y
    nx = jnp.maximum(jnp.sqrt(jnp.sum(fx * fx, axis=1, keepdims=True)), COS_EPS)
    ny = jnp.maximum(jnp.sqrt(jnp.sum(fy * fy, axis=1, keepdims=True)), COS_EPS)
    sim = jnp.matmul(fx / nx, (fy / ny).T, precision=_HIGHEST) / temperature
    eye = jnp.eye(fx.shape[0], dtype=bool)
    es = jnp.exp(sim)
    return -jnp.log(jnp.sum(jnp.where(eye, es, 0.0)) / jnp.sum(es))


if __name__ == "__main__":
    key = jax.random.PRNGKey(0)
    k1, k2, k3, k4 = jax.random.split(key, 4)
    B, C, H, W = 2, 4, 16, 16     # embedding: (B, C, H, W)
    Hm, Wm = 32, 32               # masks at another resolution -> bilinear resize

    embedd_x = jax.random.normal(k1, (B, C, H, W), dtype=jnp.float32)
    embedd_y = jax.random.normal(k2, (B, C, H, W), dtype=jnp.float32)
    mask_x = (jax.random.uniform(k3, (B, 1, Hm, Wm)) > 0.5).astype(jnp.float32)
    mask_y = (jax.random.uniform(k4, (B, 1, Hm, Wm)) > 0.5).astype(jnp.float32)

    out = contra_loss(embedd_x, embedd_y, mask_x, mask_y)
    out = jax.block_until_ready(out)

    ref = contra_loss_ref(embedd_x, embedd_y, mask_x, mask_y)
    assert jnp.allclose(out, ref, rtol=1e-3, atol=1e-5), (out, ref)
    print("KERNEL_OK")
</pallas_src>

<mosaic_0001>
module attributes {stable_mosaic.version = 11 : i64} {
  func.func @_fused_pool_kernel(%arg0: i32, %arg1: i32, %arg2: memref<2x2x16x16xf32, #tpu.memory_space<vmem>>, %arg3: memref<2x32x32xf32, #tpu.memory_space<vmem>>, %arg4: memref<16x32xf32, #tpu.memory_space<vmem>>, %arg5: memref<32x16xf32, #tpu.memory_space<vmem>>, %arg6: memref<1x2x2xf32, #tpu.memory_space<vmem>>, %arg7: memref<2x2x16xf32, #tpu.memory_space<vmem>>, %arg8: memref<2x1x16xf32, #tpu.memory_space<vmem>>) attributes {dimension_semantics = [#tpu.dimension_semantics<parallel>, #tpu.dimension_semantics<arbitrary>], iteration_bounds = array<i64: 2, 1>, scalar_prefetch = 0 : i64, scratch_operands = 2 : i64, tpu.core_type = #tpu.core_type<tc>, window_params = [{transform_indices = @transform_0, window_bounds = array<i64: 2, 2, 16, 16>}, {pipeline_mode = #tpu.pipeline_mode<synchronous>, transform_indices = @transform_1, window_bounds = array<i64: 2, 32, 32>}, {transform_indices = @transform_2, window_bounds = array<i64: 16, 32>}, {pipeline_mode = #tpu.pipeline_mode<synchronous>, transform_indices = @transform_3, window_bounds = array<i64: 32, 16>}, {transform_indices = @transform_4, window_bounds = array<i64: 1, 2, 2>}]} {
    %c0_i32 = arith.constant 0 : i32
    %0 = arith.cmpi eq, %arg1, %c0_i32 : i32
    %1 = arith.extui %0 : i1 to i32
    %c0_i32_0 = arith.constant 0 : i32
    %2 = arith.cmpi ne, %1, %c0_i32_0 : i32
    scf.if %2 {
      %cst_48 = arith.constant 0.000000e+00 : f32
      %65 = vector.broadcast %cst_48 : f32 to vector<2x2x16xf32>
      %c0_49 = arith.constant 0 : index
      %c0_50 = arith.constant 0 : index
      %c0_51 = arith.constant 0 : index
      %66 = vector.load %arg7[%c0_49, %c0_50, %c0_51] : memref<2x2x16xf32, #tpu.memory_space<vmem>>, vector<2x2x16xf32>
      tpu.vector_store %arg7[%c0_49, %c0_50, %c0_51], %65 {strides = array<i32>} : memref<2x2x16xf32, #tpu.memory_space<vmem>>, vector<2x2x16xf32>,
      %cst_52 = arith.constant 0.000000e+00 : f32
      %67 = vector.broadcast %cst_52 : f32 to vector<2x1x16xf32>
      %c0_53 = arith.constant 0 : index
      %c0_54 = arith.constant 0 : index
      %c0_55 = arith.constant 0 : index
      %68 = vector.load %arg8[%c0_53, %c0_54, %c0_55] : memref<2x1x16xf32, #tpu.memory_space<vmem>>, vector<2x1x16xf32>
      tpu.vector_store %arg8[%c0_53, %c0_54, %c0_55], %67 {strides = array<i32>} : memref<2x1x16xf32, #tpu.memory_space<vmem>>, vector<2x1x16xf32>,
    } else {
    }
    %c0 = arith.constant 0 : index
    %c0_1 = arith.constant 0 : index
    %c0_2 = arith.constant 0 : index
    %c0_3 = arith.constant 0 : index
    %3 = vector.load %arg2[%c0, %c0_1, %c0_2, %c0_3] : memref<2x2x16x16xf32, #tpu.memory_space<vmem>>, vector<2x2x16x16xf32>
    %4 = arith.mulf %3, %3 : vector<2x2x16x16xf32>
    %cst = arith.constant dense<0.000000e+00> : vector<2x16x16xf32>
    %5 = vector.multi_reduction <add>, %4, %cst [0] : vector<2x2x16x16xf32> to vector<2x16x16xf32>
    %6 = vector.shape_cast %5 : vector<2x16x16xf32> to vector<1x2x16x16xf32>
    %cst_4 = arith.constant 1.000000e-24 : f32
    %7 = vector.broadcast %cst_4 : f32 to vector<1x2x16x16xf32>
    %8 = arith.maximumf %6, %7 : vector<1x2x16x16xf32>
    %9 = math.rsqrt %8 : vector<1x2x16x16xf32>
    %10 = vector.broadcast %9 : vector<1x2x16x16xf32> to vector<2x2x16x16xf32>
    %11 = arith.mulf %3, %10 : vector<2x2x16x16xf32>
    %c0_5 = arith.constant 0 : index
    %c0_6 = arith.constant 0 : index
    %12 = vector.load %arg4[%c0_5, %c0_6] : memref<16x32xf32, #tpu.memory_space<vmem>>, vector<16x32xf32>
    %c0_7 = arith.constant 0 : index
    %c0_8 = arith.constant 0 : index
    %13 = vector.load %arg5[%c0_7, %c0_8] : memref<32x16xf32, #tpu.memory_space<vmem>>, vector<32x16xf32>
    %c0_9 = arith.constant 0 : index
    %c0_10 = arith.constant 0 : index
    %c0_11 = arith.constant 0 : index
    %14 = vector.load %arg3[%c0_9, %c0_10, %c0_11] : memref<2x32x32xf32, #tpu.memory_space<vmem>>, vector<1x32x32xf32>
    %15 = vector.shape_cast %14 : vector<1x32x32xf32> to vector<32x32xf32>
    %cst_12 = arith.constant dense<0.000000e+00> : vector<16x32xf32>
    %16 = tpu.matmul %12, %15, %cst_12 {dimension_numbers = #tpu.dot_dimension_numbers<[1], [0], [0], [1], [0, 0, 1, 1], [], []>, precision = #tpu.contract_precision<fp32>} : vector<16x32xf32>, vector<32x32xf32>, vector<16x32xf32> -> vector<16x32xf32>
    %cst_13 = arith.constant dense<0.000000e+00> : vector<16x16xf32>
    %17 = tpu.matmul %16, %13, %cst_13 {dimension_numbers = #tpu.dot_dimension_numbers<[1], [0], [0], [1], [0, 0, 1, 1], [], []>, precision = #tpu.contract_precision<fp32>} : vector<16x32xf32>, vector<32x16xf32>, vector<16x16xf32> -> vector<16x16xf32>
    %c0_14 = arith.constant 0 : index
    %c0_15 = arith.constant 0 : index
    %c0_16 = arith.constant 0 : index
    %18 = vector.load %arg7[%c0_14, %c0_15, %c0_16] : memref<2x2x16xf32, #tpu.memory_space<vmem>>, vector<1x2x16xf32>
    %19 = vector.shape_cast %18 : vector<1x2x16xf32> to vector<2x16xf32>
    %20 = vector.extract_strided_slice %11 {offsets = [0, 0, 0, 0], sizes = [1, 2, 16, 16], strides = [1, 1, 1, 1]} : vector<2x2x16x16xf32> to vector<1x2x16x16xf32>
    %21 = vector.shape_cast %20 : vector<1x2x16x16xf32> to vector<2x16x16xf32>
    %22 = vector.shape_cast %17 : vector<16x16xf32> to vector<1x16x16xf32>
    %23 = vector.broadcast %22 : vector<1x16x16xf32> to vector<2x16x16xf32>
    %24 = arith.mulf %21, %23 : vector<2x16x16xf32>
    %cst_17 = arith.constant dense<0.000000e+00> : vector<2x16xf32>
    %25 = vector.multi_reduction <add>, %24, %cst_17 [1] : vector<2x16x16xf32> to vector<2x16xf32>
    %26 = arith.addf %19, %25 : vector<2x16xf32>
    %c0_18 = arith.constant 0 : index
    %c0_19 = arith.constant 0 : index
    %c0_20 = arith.constant 0 : index
    %27 = vector.load %arg7[%c0_18, %c0_19, %c0_20] : memref<2x2x16xf32, #tpu.memory_space<vmem>>, vector<1x2x16xf32>
    %28 = vector.shape_cast %27 : vector<1x2x16xf32> to vector<2x16xf32>
    %29 = vector.shape_cast %26 : vector<2x16xf32> to vector<1x2x16xf32>
    tpu.vector_store %arg7[%c0_18, %c0_19, %c0_20], %29 {strides = array<i32>} : memref<2x2x16xf32, #tpu.memory_space<vmem>>, vector<1x2x16xf32>,
    %c0_21 = arith.constant 0 : index
    %c0_22 = arith.constant 0 : index
    %c0_23 = arith.constant 0 : index
    %30 = vector.load %arg8[%c0_21, %c0_22, %c0_23] : memref<2x1x16xf32, #tpu.memory_space<vmem>>, vector<1x1x16xf32>
    %31 = vector.shape_cast %30 : vector<1x1x16xf32> to vector<1x16xf32>
    %cst_24 = arith.constant dense<0.000000e+00> : vector<16xf32>
    %32 = vector.multi_reduction <add>, %17, %cst_24 [0] : vector<16x16xf32> to vector<16xf32>
    %33 = vector.shape_cast %32 : vector<16xf32> to vector<1x16xf32>
    %34 = arith.addf %31, %33 : vector<1x16xf32>
    %c0_25 = arith.constant 0 : index
    %c0_26 = arith.constant 0 : index
    %c0_27 = arith.constant 0 : index
    %35 = vector.load %arg8[%c0_25, %c0_26, %c0_27] : memref<2x1x16xf32, #tpu.memory_space<vmem>>, vector<1x1x16xf32>
    %36 = vector.shape_cast %35 : vector<1x1x16xf32> to vector<1x16xf32>
    %37 = vector.shape_cast %34 : vector<1x16xf32> to vector<1x1x16xf32>
    tpu.vector_store %arg8[%c0_25, %c0_26, %c0_27], %37 {strides = array<i32>} : memref<2x1x16xf32, #tpu.memory_space<vmem>>, vector<1x1x16xf32>,
    %c1 = arith.constant 1 : index
    %c0_28 = arith.constant 0 : index
    %c0_29 = arith.constant 0 : index
    %38 = vector.load %arg3[%c1, %c0_28, %c0_29] : memref<2x32x32xf32, #tpu.memory_space<vmem>>, vector<1x32x32xf32>
    %39 = vector.shape_cast %38 : vector<1x32x32xf32> to vector<32x32xf32>
    %cst_30 = arith.constant dense<0.000000e+00> : vector<16x32xf32>
    %40 = tpu.matmul %12, %39, %cst_30 {dimension_numbers = #tpu.dot_dimension_numbers<[1], [0], [0], [1], [0, 0, 1, 1], [], []>, precision = #tpu.contract_precision<fp32>} : vector<16x32xf32>, vector<32x32xf32>, vector<16x32xf32> -> vector<16x32xf32>
    %cst_31 = arith.constant dense<0.000000e+00> : vector<16x16xf32>
    %41 = tpu.matmul %40, %13, %cst_31 {dimension_numbers = #tpu.dot_dimension_numbers<[1], [0], [0], [1], [0, 0, 1, 1], [], []>, precision = #tpu.contract_precision<fp32>} : vector<16x32xf32>, vector<32x16xf32>, vector<16x16xf32> -> vector<16x16xf32>
    %c1_32 = arith.constant 1 : index
    %c0_33 = arith.constant 0 : index
    %c0_34 = arith.constant 0 : index
    %42 = vector.load %arg7[%c1_32, %c0_33, %c0_34] : memref<2x2x16xf32, #tpu.memory_space<vmem>>, vector<1x2x16xf32>
    %43 = vector.shape_cast %42 : vector<1x2x16xf32> to vector<2x16xf32>
    %44 = vector.extract_strided_slice %11 {offsets = [1, 0, 0, 0], sizes = [1, 2, 16, 16], strides = [1, 1, 1, 1]} : vector<2x2x16x16xf32> to vector<1x2x16x16xf32>
    %45 = vector.shape_cast %44 : vector<1x2x16x16xf32> to vector<2x16x16xf32>
    %46 = vector.shape_cast %41 : vector<16x16xf32> to vector<1x16x16xf32>
    %47 = vector.broadcast %46 : vector<1x16x16xf32> to vector<2x16x16xf32>
    %48 = arith.mulf %45, %47 : vector<2x16x16xf32>
    %cst_35 = arith.constant dense<0.000000e+00> : vector<2x16xf32>
    %49 = vector.multi_reduction <add>, %48, %cst_35 [1] : vector<2x16x16xf32> to vector<2x16xf32>
    %50 = arith.addf %43, %49 : vector<2x16xf32>
    %c1_36 = arith.constant 1 : index
    %c0_37 = arith.constant 0 : index
    %c0_38 = arith.constant 0 : index
    %51 = vector.load %arg7[%c1_36, %c0_37, %c0_38] : memref<2x2x16xf32, #tpu.memory_space<vmem>>, vector<1x2x16xf32>
    %52 = vector.shape_cast %51 : vector<1x2x16xf32> to vector<2x16xf32>
    %53 = vector.shape_cast %50 : vector<2x16xf32> to vector<1x2x16xf32>
    tpu.vector_store %arg7[%c1_36, %c0_37, %c0_38], %53 {strides = array<i32>} : memref<2x2x16xf32, #tpu.memory_space<vmem>>, vector<1x2x16xf32>,
    %c1_39 = arith.constant 1 : index
    %c0_40 = arith.constant 0 : index
    %c0_41 = arith.constant 0 : index
    %54 = vector.load %arg8[%c1_39, %c0_40, %c0_41] : memref<2x1x16xf32, #tpu.memory_space<vmem>>, vector<1x1x16xf32>
    %55 = vector.shape_cast %54 : vector<1x1x16xf32> to vector<1x16xf32>
    %cst_42 = arith.constant dense<0.000000e+00> : vector<16xf32>
    %56 = vector.multi_reduction <add>, %41, %cst_42 [0] : vector<16x16xf32> to vector<16xf32>
    %57 = vector.shape_cast %56 : vector<16xf32> to vector<1x16xf32>
    %58 = arith.addf %55, %57 : vector<1x16xf32>
    %c1_43 = arith.constant 1 : index
    %c0_44 = arith.constant 0 : index
    %c0_45 = arith.constant 0 : index
    %59 = vector.load %arg8[%c1_43, %c0_44, %c0_45] : memref<2x1x16xf32, #tpu.memory_space<vmem>>, vector<1x1x16xf32>
    %60 = vector.shape_cast %59 : vector<1x1x16xf32> to vector<1x16xf32>
    %61 = vector.shape_cast %58 : vector<1x16xf32> to vector<1x1x16xf32>
    tpu.vector_store %arg8[%c1_43, %c0_44, %c0_45], %61 {strides = array<i32>} : memref<2x1x16xf32, #tpu.memory_space<vmem>>, vector<1x1x16xf32>,
    %c0_i32_46 = arith.constant 0 : i32
    %62 = arith.cmpi eq, %arg1, %c0_i32_46 : i32
    %63 = arith.extui %62 : i1 to i32
    %c0_i32_47 = arith.constant 0 : i32
    %64 = arith.cmpi ne, %63, %c0_i32_47 : i32
    scf.if %64 {
      %c0_48 = arith.constant 0 : index
      %c0_49 = arith.constant 0 : index
      %c0_50 = arith.constant 0 : index
      %65 = vector.load %arg8[%c0_48, %c0_49, %c0_50] : memref<2x1x16xf32, #tpu.memory_space<vmem>>, vector<2x1x16xf32>
      %cst_51 = arith.constant dense<0.000000e+00> : vector<2x1xf32>
      %66 = vector.multi_reduction <add>, %65, %cst_51 [2] : vector<2x1x16xf32> to vector<2x1xf32>
      %c0_52 = arith.constant 0 : index
      %c0_53 = arith.constant 0 : index
      %c0_54 = arith.constant 0 : index
      %67 = vector.load %arg7[%c0_52, %c0_53, %c0_54] : memref<2x2x16xf32, #tpu.memory_space<vmem>>, vector<2x2x16xf32>
      %cst_55 = arith.constant dense<0.000000e+00> : vector<2x2xf32>
      %68 = vector.multi_reduction <add>, %67, %cst_55 [2] : vector<2x2x16xf32> to vector<2x2xf32>
      %69 = vector.broadcast %66 : vector<2x1xf32> to vector<2x2xf32>
      %70 = arith.divf %68, %69 : vector<2x2xf32>
      %c0_56 = arith.constant 0 : index
      %c0_57 = arith.constant 0 : index
      %c0_58 = arith.constant 0 : index
      %71 = vector.load %arg6[%c0_56, %c0_57, %c0_58] : memref<1x2x2xf32, #tpu.memory_space<vmem>>, vector<1x2x2xf32>
      %72 = vector.shape_cast %71 : vector<1x2x2xf32> to vector<2x2xf32>
      %73 = vector.shape_cast %70 : vector<2x2xf32> to vector<1x2x2xf32>
      tpu.vector_store %arg6[%c0_56, %c0_57, %c0_58], %73 {strides = array<i32>} : memref<1x2x2xf32, #tpu.memory_space<vmem>>, vector<1x2x2xf32>,
    } else {
    }
    return
  }
  func.func @transform_0(%arg0: i32, %arg1: i32) -> (i32, i32, i32, i32) {
    %c0_i32 = arith.constant 0 : i32
    %c0_i32_0 = arith.constant 0 : i32
    %c0_i32_1 = arith.constant 0 : i32
    return %c0_i32, %arg0, %arg1, %c0_i32_0 : i32, i32, i32, i32
  }
  func.func @transform_1(%arg0: i32, %arg1: i32) -> (i32, i32, i32) {
    %c0_i32 = arith.constant 0 : i32
    %c0_i32_0 = arith.constant 0 : i32
    %c0_i32_1 = arith.constant 0 : i32
    %c0_i32_2 = arith.constant 0 : i32
    return %c0_i32, %c0_i32_0, %c0_i32_1 : i32, i32, i32
  }
  func.func @transform_2(%arg0: i32, %arg1: i32) -> (i32, i32) {
    %c0_i32 = arith.constant 0 : i32
    %c0_i32_0 = arith.constant 0 : i32
    return %arg1, %c0_i32 : i32, i32
  }
  func.func @transform_3(%arg0: i32, %arg1: i32) -> (i32, i32) {
    %c0_i32 = arith.constant 0 : i32
    %c0_i32_0 = arith.constant 0 : i32
    %c0_i32_1 = arith.constant 0 : i32
    return %c0_i32, %c0_i32_0 : i32, i32
  }
  func.func @transform_4(%arg0: i32, %arg1: i32) -> (i32, i32, i32) {
    %c0_i32 = arith.constant 0 : i32
    %c0_i32_0 = arith.constant 0 : i32
    %c0_i32_1 = arith.constant 0 : i32
    return %arg0, %c0_i32, %c0_i32_0 : i32, i32, i32
  }
}

</mosaic_0001>

<llo_original>
// kernel: tpu_custom_call.1
$region0: #{tpu_custom_call.1}
  #allocation0 [shape = 'u32[]', space=smem, size = 0x4, offset = 0x4, fixed_abs, tag = 'smem constant byte address 0x4 - core index']
  #allocation1 [shape = 'u32[144,128]{1,0:T(1,128)}', space=vmem, size = 0x12000, scoped, tag = 'internal scratch']
  #allocation2 [shape = 'f32[2,2,16]{2,1,0:T(2,128)}', space=vmem, size = 0x800, scoped, tag = 'scratch operand']
  #allocation3 [shape = 'f32[2,1,16]{2,1,0:T(1,128)}', space=vmem, size = 0x400, scoped, tag = 'scratch operand']
  #allocation10 [shape = 's32[]', space=sflag, size = 0x4, offset = 0, fixed_abs, tag = 'sflag constant byte address 0x0 - dummy sync flag']
  %s0 = inlined_call_operand.hbm [shape: f32[2,4,16,16], index: 0, kind: input, shape index: {}]
  %s1 = inlined_call_operand.hbm [shape: f32[2,32,32], index: 1, kind: input, shape index: {}]
  %s2 = inlined_call_operand.vmem [shape: f32[16,32], index: 2, kind: input, shape index: {}]
  %s3 = inlined_call_operand.vmem [shape: f32[32,16], index: 3, kind: input, shape index: {}]
  %s4 = inlined_call_operand.hbm [shape: f32[2,2,2], index: 4, kind: output, shape index: {}]
  %s5 = sld [smem:[#allocation0]]
  $region65: #{tpu_custom_call.1} parent=0
    _
  %s7 = ssub.s32 1, %s5
  %s8 = scalar_select 0, %s7, %s5
  $region1: #{tpu_custom_call.1} parent=0
    #allocation4 [shape = 'u8[65536]{0}', space=vmem, size = 0x10000, scoped, tag = 'input window, operand 0']
    #allocation5 [shape = 's32[2]{0}', space=sflag, size = 0x8, scoped, tag = 'scoped memory for tpu_custom_call.1']
    #allocation6 [shape = 's32[2]{0}', space=sflag, size = 0x8, scoped, tag = 'scoped memory for tpu_custom_call.1']
    #allocation7 [shape = 'u8[32768]{0}', space=vmem, size = 0x8000, scoped, tag = 'input window, operand 1, single buffered']
    #allocation8 [shape = 's32[1]{0}', space=sflag, size = 0x4, scoped, tag = 'scoped memory for tpu_custom_call.1']
    #allocation9 [shape = 'u8[2048]{0}', space=vmem, size = 0x800, scoped, tag = 'output window, operand 0']
    %9 = vsyncpa [#allocation5], 0
    %s10 = scalar_lea.sflag [#allocation5], 1
    %11 = vsyncpa %s10, 0
    %12 = vsyncpa [#allocation8], 0
    %13 = vsyncpa [#allocation6], 0
    %s14 = scalar_lea.sflag [#allocation6], 1
    %15 = vsyncpa %s14, 0
    loop: start=0, step=1, limit=4
    $region2: #{tpu_custom_call.1} parent=1 // loop_pre_header
      _
    $region3: #{tpu_custom_call.1} parent=1 // loop_header
      %s17 = sphi 0, %s21
      %p18 = scmp.ge.s32.totalorder %s17, 4
      %s24 = sphi 0, %s36
      %s25 = sphi 0, %s32
      %s26 = sphi 0, %s24
      %s27 = sphi 0, %s25
      %s28 = sphi 0, %s26
      %s29 = sphi 0, %s27
      %s41 = sphi 0, %s43
      %s44 = sphi 0, %s41
      %s45 = sphi 0, %s44
      %s61 = sphi 0, %s45
      %s65 = sphi 0, %s65
      %s67 = sphi 0, %s65
      %s68 = sphi 0, %s67
      %s82 = sphi 0, %s68
      %s88 = sphi 0, %s90
      %s91 = sphi 0, %s88
      %s92 = sphi 0, %s91
      %s108 = sphi 0, %s92
      %s112 = sphi 0, %s112
      %s114 = sphi 0, %s112
      %s115 = sphi 0, %s114
      %s129 = sphi 0, %s115
      %s135 = sphi 0, %s137
      %s138 = sphi 0, %s135
      %s139 = sphi 0, %s138
      %s155 = sphi 0, %s139
    $region4: #{tpu_custom_call.1} parent=1 // loop_header_branch
      %20 = sbr.rel (%p18) target = $region8
    $region5: #{tpu_custom_call.1} parent=1 // loop_body
      %s22 = ssub.s32 %s17, 1
      %s23 = ssub.s32 %s17, 2
      %s30 = sadd.s32 1, %s25
      %p31 = scmp.ge.s32.totalorder %s30, 1
      %s32 = scalar_select %p31, 0, %s30
      %s33 = sadd.s32 1, %s24
      %s34 = scalar_select %p31, %s33, %s24
      %p35 = scmp.ge.s32.totalorder %s34, 2
      %s36 = scalar_select %p35, 0, %s34
      %s37 = ssub.s32 %s24, %s36
      %s38 = ssub.s32 %s25, %s32
      %s39 = sor.u32 %s37, %s38
      %p40 = scmp.eq.s32.totalorder %s39, 0
      %s42 = sadd.s32 %s41, 1
      %s43 = scalar_select %p40, %s41, %s42
      %p46 = pneg %p40
      %p47 = scmp.eq.s32.totalorder %s17, 1
      %p48 = por %p46, %p47
      %p49 = scmp.ne.s32.totalorder %s41, %s44
      %p50 = scmp.eq.s32.totalorder %s17, 0
      %p51 = por %p49, %p50
      %p52 = scmp.ne.s32.totalorder %s41, %s44
      %p53 = scmp.eq.s32.totalorder %s22, 1
      %p54 = por %p52, %p53
      %p55 = scmp.ne.s32.totalorder %s44, %s45
      %p56 = scmp.eq.s32.totalorder %s22, 0
      %p57 = por %p55, %p56
      %p58 = scmp.ne.s32.totalorder %s44, %s45
      %p59 = scmp.eq.s32.totalorder %s23, 1
      %p60 = por %p58, %p59
      %p62 = scmp.ne.s32.totalorder %s45, %s61
      %p63 = scmp.eq.s32.totalorder %s23, 0
      %p64 = por %p62, %p63
      %s66 = sadd.s32 %s65, 1
      %p69 = scmp.eq.s32.totalorder %s17, 1
      %p70 = scmp.ne.s32.totalorder %s65, %s67
      %p71 = scmp.eq.s32.totalorder %s17, 0
      %p72 = por %p70, %p71
      %p73 = scmp.ne.s32.totalorder %s65, %s67
      %p74 = scmp.eq.s32.totalorder %s22, 1
      %p75 = por %p73, %p74
      %p76 = scmp.ne.s32.totalorder %s67, %s68
      %p77 = scmp.eq.s32.totalorder %s22, 0
      %p78 = por %p76, %p77
      %p79 = scmp.ne.s32.totalorder %s67, %s68
      %p80 = scmp.eq.s32.totalorder %s23, 1
      %p81 = por %p79, %p80
      %p83 = scmp.ne.s32.totalorder %s68, %s82
      %p84 = scmp.eq.s32.totalorder %s23, 0
      %p85 = por %p83, %p84
      %s86 = ssub.s32 %s25, %s32
      %p87 = scmp.eq.s32.totalorder %s86, 0
      %s89 = sadd.s32 %s88, 1
      %s90 = scalar_select %p87, %s88, %s89
      %p93 = pneg %p87
      %p94 = scmp.eq.s32.totalorder %s17, 1
      %p95 = por %p93, %p94
      %p96 = scmp.ne.s32.totalorder %s88, %s91
      %p97 = scmp.eq.s32.totalorder %s17, 0
      %p98 = por %p96, %p97
      %p99 = scmp.ne.s32.totalorder %s88, %s91
      %p100 = scmp.eq.s32.totalorder %s22, 1
      %p101 = por %p99, %p100
      %p102 = scmp.ne.s32.totalorder %s91, %s92
      %p103 = scmp.eq.s32.totalorder %s22, 0
      %p104 = por %p102, %p103
      %p105 = scmp.ne.s32.totalorder %s91, %s92
      %p106 = scmp.eq.s32.totalorder %s23, 1
      %p107 = por %p105, %p106
      %p109 = scmp.ne.s32.totalorder %s92, %s108
      %p110 = scmp.eq.s32.totalorder %s23, 0
      %p111 = por %p109, %p110
      %s113 = sadd.s32 %s112, 1
      %p116 = scmp.eq.s32.totalorder %s17, 1
      %p117 = scmp.ne.s32.totalorder %s112, %s114
      %p118 = scmp.eq.s32.totalorder %s17, 0
      %p119 = por %p117, %p118
      %p120 = scmp.ne.s32.totalorder %s112, %s114
      %p121 = scmp.eq.s32.totalorder %s22, 1
      %p122 = por %p120, %p121
      %p123 = scmp.ne.s32.totalorder %s114, %s115
      %p124 = scmp.eq.s32.totalorder %s22, 0
      %p125 = por %p123, %p124
      %p126 = scmp.ne.s32.totalorder %s114, %s115
      %p127 = scmp.eq.s32.totalorder %s23, 1
      %p128 = por %p126, %p127
      %p130 = scmp.ne.s32.totalorder %s115, %s129
      %p131 = scmp.eq.s32.totalorder %s23, 0
      %p132 = por %p130, %p131
      %s133 = ssub.s32 %s24, %s36
      %p134 = scmp.eq.s32.totalorder %s133, 0
      %s136 = sadd.s32 %s135, 1
      %s137 = scalar_select %p134, %s135, %s136
      %p140 = pneg %p134
      %p141 = scmp.eq.s32.totalorder %s17, 1
      %p142 = por %p140, %p141
      %p143 = scmp.ne.s32.totalorder %s135, %s138
      %p144 = scmp.eq.s32.totalorder %s17, 0
      %p145 = por %p143, %p144
      %p146 = scmp.ne.s32.totalorder %s135, %s138
      %p147 = scmp.eq.s32.totalorder %s22, 1
      %p148 = por %p146, %p147
      %p149 = scmp.ne.s32.totalorder %s138, %s139
      %p150 = scmp.eq.s32.totalorder %s22, 0
      %p151 = por %p149, %p150
      %p152 = scmp.ne.s32.totalorder %s138, %s139
      %p153 = scmp.eq.s32.totalorder %s23, 1
      %p154 = por %p152, %p153
      %p156 = scmp.ne.s32.totalorder %s139, %s155
      %p157 = scmp.eq.s32.totalorder %s23, 0
      %p158 = por %p156, %p157
      %p159 = scmp.le.s32.totalorder 1, %s17
      %p160 = scmp.lt.s32.totalorder %s17, 3
      %p161 = pnand %p159, %p160
      %p162 = pneg %p161
      // Predicated region
      $region9: #{tpu_custom_call.1} parent=5 // pred_check
        _
      $region10: #{tpu_custom_call.1} parent=5 // pred_check_branch
        %164 = sbr.rel (%p161) target = $region12
      $region11: #{tpu_custom_call.1} parent=5 // pred_region
        %s165 = ssub.s32 %s17, 1
        // Predicated region
        $region13: #{tpu_custom_call.1} parent=11 // pred_check
          %p166 = pneg %p78
        $region14: #{tpu_custom_call.1} parent=11 // pred_check_branch
          %168 = sbr.rel (%p166) target = $region16
        $region15: #{tpu_custom_call.1} parent=11 // pred_region
          %s170 = ssub.s32 1024, 1024
          %171 = vsyncadd [#allocation8], %s170
          %s172 = sshll.u32 [#allocation7], 4
          %s173 = int_to_ptr.vmem [resolvable:$true] %s172
          %178 = dma.hbm_to_vmem [thread:$0]  %s1, 1024, %s173, [#allocation8], 128, 128, 8
        $region16: #{tpu_custom_call.1} parent=11 // pred_fallthru
          _
        // Predicated region
        $region17: #{tpu_custom_call.1} parent=11 // pred_check
          %p179 = pneg %p104
        $region18: #{tpu_custom_call.1} parent=11 // pred_check_branch
          %181 = sbr.rel (%p179) target = $region20
        $region19: #{tpu_custom_call.1} parent=11 // pred_region
          %s182 = smul.u32 2, %s27
          %p183 = scmp.lt.s32.totalorder %s182, 1
          %s184 = scalar_select %p183, %s182, 1
          %s185 = smul.addr %s184, 8
          %s186 = scalar_lea.vmem %s2, %s185
          %s187 = smul.u32 2, %s27
        $region20: #{tpu_custom_call.1} parent=11 // pred_fallthru
          _
        // Predicated region
        $region21: #{tpu_custom_call.1} parent=11 // pred_check
          %p188 = pneg %p125
        $region22: #{tpu_custom_call.1} parent=11 // pred_check_branch
          %190 = sbr.rel (%p188) target = $region24
        $region23: #{tpu_custom_call.1} parent=11 // pred_region
          _
        $region24: #{tpu_custom_call.1} parent=11 // pred_fallthru
          _
      $region12: #{tpu_custom_call.1} parent=5 // pred_fallthru
        _
      %p191 = scmp.lt.s32.totalorder %s17, 2
      // Predicated region
      $region25: #{tpu_custom_call.1} parent=5 // pred_check
        %p192 = pneg %p191
      $region26: #{tpu_custom_call.1} parent=5 // pred_check_branch
        %194 = sbr.rel (%p192) target = $region28
      $region27: #{tpu_custom_call.1} parent=5 // pred_region
        // Predicated region
        $region29: #{tpu_custom_call.1} parent=27 // pred_check
          %p195 = pneg %p51
        $region30: #{tpu_custom_call.1} parent=27 // pred_check_branch
          %197 = sbr.rel (%p195) target = $region32
        $region31: #{tpu_custom_call.1} parent=27 // pred_region
          #allocation11 [shape = 'u32[6]{0}', space=smem, size = 0x18, scoped, tag = 'DMA stride descriptor']
          %s198 = sand.u32 %s41, 1
          %s199 = scalar_lea.sflag [#allocation5], %s198
          %s200 = sand.u32 %s41, 1
          %s201 = smul.addr %s200, 64
          %s202 = scalar_lea.vmem [#allocation4], %s201
          %s203 = smul.u32 2, %s24
          %s204 = smul.u32 2, %s25
          %s206 = ssub.s32 1024, 1024
          %207 = vsyncadd %s199, %s206
          %s208 = smul.addr %s203, 2
          %s209 = sadd.s32 %s204, %s208
          %s210 = smul.addr %s209, 128
          %s211 = scalar_lea.hbm %s0, %s210
          %s213 = sshll.u32 1, 14
          %s214 = sxor.u32 4294967295, %s213
          %s216 = sld [smem:[#allocation0]]
          %s217 = sadd.s32 2, %s216
          %s219 = sshll.u32 7, 26
          %s220 = sxor.u32 4294967295, %s219
          %s221 = sand.u32 0, %s220
          %s222 = sshll.u32 %s217, 26
          %s223 = sor.u32 %s221, %s222
          %s224 = sshll.u32 %s202, 4
          %s225 = int_to_ptr.vmem [resolvable:$true] %s224
          %231 = sst [smem:[#allocation11]] 1024
          %s232 = scalar_lea.smem [#allocation11], 1
          %233 = sst [smem:[%s232]] 512
          %s234 = scalar_lea.smem [#allocation11], 2
          %235 = sst [smem:[%s234]] 4
          %s236 = scalar_lea.smem [#allocation11], 3
          %237 = sst [smem:[%s236]] 128
          %s238 = scalar_lea.smem [#allocation11], 4
          %239 = sst [smem:[%s238]] 128
          %s240 = scalar_lea.smem [#allocation11], 5
          %241 = sst [smem:[%s240]] 8
          %243 = dma.general %s211, 1024, %s225, %s199, [#allocation10], [#allocation11], %s223, 0
        $region32: #{tpu_custom_call.1} parent=27 // pred_fallthru
          _
      $region28: #{tpu_custom_call.1} parent=5 // pred_fallthru
        _
      %p244 = scmp.le.s32.totalorder 1, %s17
      %p245 = scmp.lt.s32.totalorder %s17, 3
      %p246 = pnand %p244, %p245
      %p247 = pneg %p246
      // Predicated region
      $region33: #{tpu_custom_call.1} parent=5 // pred_check
        _
      $region34: #{tpu_custom_call.1} parent=5 // pred_check_branch
        %249 = sbr.rel (%p246) target = $region36
      $region35: #{tpu_custom_call.1} parent=5 // pred_region
        %s250 = ssub.s32 %s17, 1
        %s251 = sand.u32 %s44, 1
        %s252 = scalar_lea.sflag [#allocation5], %s251
        %s253 = sand.u32 %s44, 1
        %s254 = smul.addr %s253, 64
        %s255 = scalar_lea.vmem [#allocation4], %s254
        // Predicated region
        $region37: #{tpu_custom_call.1} parent=35 // pred_check
          %p256 = pneg %p57
        $region38: #{tpu_custom_call.1} parent=35 // pred_check_branch
          %258 = sbr.rel (%p256) target = $region40
        $region39: #{tpu_custom_call.1} parent=35 // pred_region
          %259 = dma.done %s252, 1024
        $region40: #{tpu_custom_call.1} parent=35 // pred_fallthru
          _
        // Predicated region
        $region41: #{tpu_custom_call.1} parent=35 // pred_check
          %p260 = pneg %p78
        $region42: #{tpu_custom_call.1} parent=35 // pred_check_branch
          %262 = sbr.rel (%p260) target = $region44
        $region43: #{tpu_custom_call.1} parent=35 // pred_region
          %263 = dma.done [#allocation8], 1024
        $region44: #{tpu_custom_call.1} parent=35 // pred_fallthru
          _
        %s264 = sand.u32 %s44, 1
        %s265 = scalar_lea.sflag [#allocation5], %s264
        %s266 = sand.u32 %s44, 1
        %s267 = smul.addr %s266, 64
        %s268 = scalar_lea.vmem [#allocation4], %s267
        %p269 = pneg %p57
        %p270 = pneg %p54
        %p271 = pneg %p78
        %p272 = pneg %p75
        %s273 = smul.u32 2, %s27
        %p274 = scmp.lt.s32.totalorder %s273, 1
        %s275 = scalar_select %p274, %s273, 1
        %s276 = smul.addr %s275, 8
        %s277 = scalar_lea.vmem %s2, %s276
        %p278 = pneg %p104
        %p279 = pneg %p101
        %p280 = pneg %p125
        %p281 = pneg %p122
        %p282 = pneg %p151
        %p283 = pneg %p148
        %s284 = sand.u32 %s138, 1
        %s285 = scalar_lea.sflag [#allocation6], %s284
        %s286 = sand.u32 %s138, 1
        %s287 = smul.addr %s286, 2
        %s288 = scalar_lea.vmem [#allocation9], %s287
        %s289 = smul.u32 2, %s26
        %s290 = smul.u32 2, %s27
        %s291 = smul.u32 2, %s27
        %p292 = scmp.lt.s32.totalorder %s291, 1
        %s293 = scalar_select %p292, %s291, 1
        %s294 = smul.addr %s293, 8
        %s295 = scalar_lea.vmem %s2, %s294
        %s296 = smul.u32 2, %s27
        %p297 = scmp.eq.s32.totalorder %s27, 0
        // Predicated region
        $region45: #{tpu_custom_call.1} parent=35 // pred_check
          %p298 = pneg %p297
        $region46: #{tpu_custom_call.1} parent=35 // pred_check_branch
          %300 = sbr.rel (%p298) target = $region48
        $region47: #{tpu_custom_call.1} parent=35 // pred_region
          %vm301 = vcmask 123904
          %302 = vst.msk [vmem:[#allocation2] sm:$0x3] %vm301, 0.0
          %303 = vst.msk [vmem:[#allocation2 + $0x2] sm:$0x3] %vm301, 0.0
          %vm304 = vcmask 122880
          %305 = vst.msk [vmem:[#allocation3] sm:$0x1] %vm304, 0.0
          %306 = vst.msk [vmem:[#allocation3 + $0x1] sm:$0x1] %vm304, 0.0
        $region48: #{tpu_custom_call.1} parent=35 // pred_fallthru
          _
        %v307 = vld [vmem:[%s255] sm:$0xff]
        %v308 = vld [vmem:[%s255 + $0x8] sm:$0xff]
        %v309 = vld [vmem:[%s255 + $0x10] sm:$0xff]
        %v310 = vld [vmem:[%s255 + $0x18] sm:$0xff]
        %v311 = vld [vmem:[%s255 + $0x20] sm:$0xff]
        %v312 = vld [vmem:[%s255 + $0x28] sm:$0xff]
        %v313 = vld [vmem:[%s255 + $0x30] sm:$0xff]
        %v314 = vld [vmem:[%s255 + $0x38] sm:$0xff]
        %v315 = vmul.f32 %v307, %v307
        %v316 = vmul.f32 %v308, %v308
        %v317 = vmul.f32 %v309, %v309
        %v318 = vmul.f32 %v310, %v310
        %v319 = vmul.f32 %v311, %v311
        %v320 = vmul.f32 %v312, %v312
        %v321 = vmul.f32 %v313, %v313
        %v322 = vmul.f32 %v314, %v314
        %vm323 = vcmask 130048
        %v324 = vsel %vm323, %v315, 0.0
        %v325 = vsel %vm323, %v319, 0.0
        %v326 = vadd.f32 %v324, %v325
        %v327 = vsel %vm323, %v316, 0.0
        %v328 = vsel %vm323, %v320, 0.0
        %v329 = vadd.f32 %v327, %v328
        %v330 = vsel %vm323, %v317, 0.0
        %v331 = vsel %vm323, %v321, 0.0
        %v332 = vadd.f32 %v330, %v331
        %v333 = vsel %vm323, %v318, 0.0
        %v334 = vsel %vm323, %v322, 0.0
        %v335 = vadd.f32 %v333, %v334
        %v336 = vmax.f32 %v326, 1e-24
        %v337 = vmax.f32 %v329, 1e-24
        %v338 = vmax.f32 %v332, 1e-24
        %v339 = vmax.f32 %v335, 1e-24
        %v340 = vrsqrt.pop %v336
        %v341 = vrsqrt.pop %v337
        %v342 = vrsqrt.pop %v338
        %v343 = vrsqrt.pop %v339
        %v344 = vmul.f32 %v307, %v340
        %v345 = vmul.f32 %v308, %v341
        %v346 = vmul.f32 %v309, %v342
        %v347 = vmul.f32 %v310, %v343
        %v348 = vmul.f32 %v311, %v340
        %v349 = vmul.f32 %v312, %v341
        %v350 = vmul.f32 %v313, %v342
        %v351 = vmul.f32 %v314, %v343
        %v352 = vld [vmem:[%s295] sm:$0xff]
        %v353 = vld [vmem:[%s295 + $0x8] sm:$0xff]
        %v354 = vld [vmem:[%s3] sm:$0xff]
        %v355 = vld [vmem:[%s3 + $0x8] sm:$0xff]
        %v356 = vld [vmem:[%s3 + $0x10] sm:$0xff]
        %v357 = vld [vmem:[%s3 + $0x18] sm:$0xff]
        %v358 = vld [vmem:[#allocation7] sm:$0xff]
        %v359 = vld [vmem:[#allocation7 + $0x8] sm:$0xff]
        %v360 = vld [vmem:[#allocation7 + $0x10] sm:$0xff]
        %v361 = vld [vmem:[#allocation7 + $0x18] sm:$0xff]
        %vm362 = vcmask 261120
        %v364 = vsel %vm362, %v352, 0
        %v367 = vsel %vm362, %v353, 0
        %369 = vmatprep.subr.mxu0 0.0
        %v370 = vand.u32 %v358, 4294901760
        %371 = vmatpush1.msra.mxu0 %v370
        %372 = vmatprep.subr.mxu0 0.0
        %v373 = vand.u32 %v359, 4294901760
        %374 = vmatpush1.msra.mxu0 %v373
        %375 = vmatprep.subr.mxu0 0.0
        %v376 = vand.u32 %v360, 4294901760
        %377 = vmatpush1.msra.mxu0 %v376
        %378 = vmatprep.subr.mxu0 0.0
        %v379 = vand.u32 %v361, 4294901760
        %380 = vmatpush1.msra.mxu0 %v379
        %381 = vmatprep.subr.mxu0 0.0
        %382 = vmatpush1.msra.mxu0 0.0
        %383 = vmatprep.subr.mxu0 0.0
        %384 = vmatpush1.msra.mxu0 0.0
        %385 = vmatprep.subr.mxu0 0.0
        %386 = vmatpush1.msra.mxu0 0.0
        %387 = vmatprep.subr.mxu0 0.0
        %388 = vmatpush1.msra.mxu0 0.0
        %389 = vmatprep.subr.mxu0 0.0
        %390 = vmatpush1.msra.mxu0 0.0
        %391 = vmatprep.subr.mxu0 0.0
        %392 = vmatpush1.msra.mxu0 0.0
        %393 = vmatprep.subr.mxu0 0.0
        %394 = vmatpush1.msra.mxu0 0.0
        %395 = vmatprep.subr.mxu0 0.0
        %396 = vmatpush1.msra.mxu0 0.0
        %397 = vmatprep.subr.mxu0 0.0
        %398 = vmatpush1.msra.mxu0 0.0
        %399 = vmatprep.subr.mxu0 0.0
        %400 = vmatpush1.msra.mxu0 0.0
        %401 = vmatprep.subr.mxu0 0.0
        %402 = vmatpush1.msra.mxu0 0.0
        %403 = vmatprep.subr.mxu0 0.0
        %404 = vmatpush1.msra.mxu0 0.0
        %405 = vmatprep.subr.mxu0 0.0
        %406 = vmatpush1.msra.mxu0 0.0
        %407 = vmatprep.subr.mxu0 0.0
        %408 = vmatpush1.msra.mxu0 0.0
        %409 = vmatprep.subr.mxu0 0.0
        %410 = vmatpush1.msra.mxu0 0.0
        %411 = vmatprep.subr.mxu0 0.0
        %412 = vmatpush1.msra.mxu0 0.0
        %413 = vmatprep.subr.mxu0 0.0
        %414 = vmatpush1.msra.mxu0 0.0
        %415 = vmatprep.subr.mxu0 0.0
        %416 = vmatpush1.msra.mxu0 0.0
        %417 = vmatprep.subr.mxu0 0.0
        %418 = vmatpush1.msra.mxu0 0.0
        %419 = vmatprep.subr.mxu0 0.0
        %420 = vmatpush1.msra.mxu0 0.0
        %421 = vmatprep.subr.mxu0 0.0
        %422 = vmatpush1.msra.mxu0 0.0
        %423 = vmatprep.subr.mxu0 0.0
        %424 = vmatpush1.msra.mxu0 0.0
        %425 = vmatprep.subr.mxu0 0.0
        %426 = vmatpush1.msra.mxu0 0.0
        %427 = vmatprep.subr.mxu0 0.0
        %428 = vmatpush1.msra.mxu0 0.0
        %429 = vmatprep.subr.mxu0 0.0
        %430 = vmatpush1.msra.mxu0 0.0
        %431 = vmatprep.subr.mxu0 0.0
        %432 = vmatpush1.msra.mxu0 0.0
        %433 = vmatprep.subr.mxu0 0.0
        %434 = vmatpush1.msra.mxu0 0.0
        %435 = vmatprep.subr.mxu0 0.0
        %436 = vmatpush1.msra.mxu0 0.0
        %437 = vmatprep.mubr.f32.mxu0 0.0
        %v438 = vand.u32 %v364, 4294901760
        %v439 = vsub.f32 %v364, %v438
        %v440 = vand.u32 %v439, 4294901760
        %v441 = vsub.f32 %v439, %v440
        %v442 = vand.u32 %v441, 4294901760
        %443 = vmatmul.mubr.f32.gmra.mrb[0].mxu0 %v442
        %v444 = vpop.f32.mrb[0].mxu0
        %v445 = vadd.f32 0.0, %v444
        %v446 = vpop.f32.mrb[0].mxu0
        %447 = vmatprep.mubr.f32.mxu0 0.0
        %v448 = vand.u32 %v367, 4294901760
        %v449 = vsub.f32 %v367, %v448
        %v450 = vand.u32 %v449, 4294901760
        %v451 = vsub.f32 %v449, %v450
        %v452 = vand.u32 %v451, 4294901760
        %453 = vmatmul.mubr.f32.gmra.mrb[0].mxu0 %v452
        %v454 = vpop.f32.mrb[0].mxu0
        %v455 = vadd.f32 0.0, %v454
        %v456 = vpop.f32.mrb[0].mxu0
        %457 = vdwg.mxu0
        %458 = vmatprep.subr.mxu0 0.0
        %v459 = vand.u32 %v358, 4294901760
        %v460 = vsub.f32 %v358, %v459
        %v461 = vand.u32 %v460, 4294901760
        %v462 = vsub.f32 %v460, %v461
        %v463 = vand.u32 %v462, 4294901760
        %464 = vmatpush1.msra.mxu0 %v463
        %465 = vmatprep.subr.mxu0 0.0
        %v466 = vand.u32 %v359, 4294901760
        %v467 = vsub.f32 %v359, %v466
        %v468 = vand.u32 %v467, 4294901760
        %v469 = vsub.f32 %v467, %v468
        %v470 = vand.u32 %v469, 4294901760
        %471 = vmatpush1.msra.mxu0 %v470
        %472 = vmatprep.subr.mxu0 0.0
        %v473 = vand.u32 %v360, 4294901760
        %v474 = vsub.f32 %v360, %v473
        %v475 = vand.u32 %v474, 4294901760
        %v476 = vsub.f32 %v474, %v475
        %v477 = vand.u32 %v476, 4294901760
        %478 = vmatpush1.msra.mxu0 %v477
        %479 = vmatprep.subr.mxu0 0.0
        %v480 = vand.u32 %v361, 4294901760
        %v481 = vsub.f32 %v361, %v480
        %v482 = vand.u32 %v481, 4294901760
        %v483 = vsub.f32 %v481, %v482
        %v484 = vand.u32 %v483, 4294901760
        %485 = vmatpush1.msra.mxu0 %v484
        %486 = vmatprep.subr.mxu0 0.0
        %487 = vmatpush1.msra.mxu0 0.0
        %488 = vmatprep.subr.mxu0 0.0
        %489 = vmatpush1.msra.mxu0 0.0
        %490 = vmatprep.subr.mxu0 0.0
        %491 = vmatpush1.msra.mxu0 0.0
        %492 = vmatprep.subr.mxu0 0.0
        %493 = vmatpush1.msra.mxu0 0.0
        %494 = vmatprep.subr.mxu0 0.0
        %495 = vmatpush1.msra.mxu0 0.0
        %496 = vmatprep.subr.mxu0 0.0
        %497 = vmatpush1.msra.mxu0 0.0
        %498 = vmatprep.subr.mxu0 0.0
        %499 = vmatpush1.msra.mxu0 0.0
        %500 = vmatprep.subr.mxu0 0.0
        %501 = vmatpush1.msra.mxu0 0.0
        %502 = vmatprep.subr.mxu0 0.0
        %503 = vmatpush1.msra.mxu0 0.0
        %504 = vmatprep.subr.mxu0 0.0
        %505 = vmatpush1.msra.mxu0 0.0
        %506 = vmatprep.subr.mxu0 0.0
        %507 = vmatpush1.msra.mxu0 0.0
        %508 = vmatprep.subr.mxu0 0.0
        %509 = vmatpush1.msra.mxu0 0.0
        %510 = vmatprep.subr.mxu0 0.0
        %511 = vmatpush1.msra.mxu0 0.0
        %512 = vmatprep.subr.mxu0 0.0
        %513 = vmatpush1.msra.mxu0 0.0
        %514 = vmatprep.subr.mxu0 0.0
        %515 = vmatpush1.msra.mxu0 0.0
        %516 = vmatprep.subr.mxu0 0.0
        %517 = vmatpush1.msra.mxu0 0.0
        %518 = vmatprep.subr.mxu0 0.0
        %519 = vmatpush1.msra.mxu0 0.0
        %520 = vmatprep.subr.mxu0 0.0
        %521 = vmatpush1.msra.mxu0 0.0
        %522 = vmatprep.subr.mxu0 0.0
        %523 = vmatpush1.msra.mxu0 0.0
        %524 = vmatprep.subr.mxu0 0.0
        %525 = vmatpush1.msra.mxu0 0.0
        %526 = vmatprep.subr.mxu0 0.0
        %527 = vmatpush1.msra.mxu0 0.0
        %528 = vmatprep.subr.mxu0 0.0
        %529 = vmatpush1.msra.mxu0 0.0
        %530 = vmatprep.subr.mxu0 0.0
        %531 = vmatpush1.msra.mxu0 0.0
        %532 = vmatprep.subr.mxu0 0.0
        %533 = vmatpush1.msra.mxu0 0.0
        %534 = vmatprep.subr.mxu0 0.0
        %535 = vmatpush1.msra.mxu0 0.0
        %536 = vmatprep.subr.mxu0 0.0
        %537 = vmatpush1.msra.mxu0 0.0
        %538 = vmatprep.subr.mxu0 0.0
        %539 = vmatpush1.msra.mxu0 0.0
        %540 = vmatprep.subr.mxu0 0.0
        %541 = vmatpush1.msra.mxu0 0.0
        %542 = vmatprep.mubr.f32.mxu0 0.0
        %v543 = vand.u32 %v364, 4294901760
        %544 = vmatmul.mubr.f32.gmra.mrb[0].mxu0 %v543
        %v545 = vpop.f32.mrb[0].mxu0
        %v546 = vadd.f32 %v445, %v545
        %v547 = vpop.f32.mrb[0].mxu0
        %548 = vmatprep.mubr.f32.mxu0 0.0
        %v549 = vand.u32 %v367, 4294901760
        %550 = vmatmul.mubr.f32.gmra.mrb[0].mxu0 %v549
        %v551 = vpop.f32.mrb[0].mxu0
        %v552 = vadd.f32 %v455, %v551
        %v553 = vpop.f32.mrb[0].mxu0
        %554 = vdwg.mxu0
        %555 = vmatprep.subr.mxu0 0.0
        %v556 = vand.u32 %v358, 4294901760
        %v557 = vsub.f32 %v358, %v556
        %558 = vmatpush1.msra.mxu0 %v557
        %559 = vmatprep.subr.mxu0 0.0
        %v560 = vand.u32 %v359, 4294901760
        %v561 = vsub.f32 %v359, %v560
        %562 = vmatpush1.msra.mxu0 %v561
        %563 = vmatprep.subr.mxu0 0.0
        %v564 = vand.u32 %v360, 4294901760
        %v565 = vsub.f32 %v360, %v564
        %566 = vmatpush1.msra.mxu0 %v565
        %567 = vmatprep.subr.mxu0 0.0
        %v568 = vand.u32 %v361, 4294901760
        %v569 = vsub.f32 %v361, %v568
        %570 = vmatpush1.msra.mxu0 %v569
        %571 = vmatprep.subr.mxu0 0.0
        %572 = vmatpush1.msra.mxu0 0.0
        %573 = vmatprep.subr.mxu0 0.0
        %574 = vmatpush1.msra.mxu0 0.0
        %575 = vmatprep.subr.mxu0 0.0
        %576 = vmatpush1.msra.mxu0 0.0
        %577 = vmatprep.subr.mxu0 0.0
        %578 = vmatpush1.msra.mxu0 0.0
        %579 = vmatprep.subr.mxu0 0.0
        %580 = vmatpush1.msra.mxu0 0.0
        %581 = vmatprep.subr.mxu0 0.0
        %582 = vmatpush1.msra.mxu0 0.0
        %583 = vmatprep.subr.mxu0 0.0
        %584 = vmatpush1.msra.mxu0 0.0
        %585 = vmatprep.subr.mxu0 0.0
        %586 = vmatpush1.msra.mxu0 0.0
        %587 = vmatprep.subr.mxu0 0.0
        %588 = vmatpush1.msra.mxu0 0.0
        %589 = vmatprep.subr.mxu0 0.0
        %590 = vmatpush1.msra.mxu0 0.0
        %591 = vmatprep.subr.mxu0 0.0
        %592 = vmatpush1.msra.mxu0 0.0
        %593 = vmatprep.subr.mxu0 0.0
        %594 = vmatpush1.msra.mxu0 0.0
        %595 = vmatprep.subr.mxu0 0.0
        %596 = vmatpush1.msra.mxu0 0.0
        %597 = vmatprep.subr.mxu0 0.0
        %598 = vmatpush1.msra.mxu0 0.0
        %599 = vmatprep.subr.mxu0 0.0
        %600 = vmatpush1.msra.mxu0 0.0
        %601 = vmatprep.subr.mxu0 0.0
        %602 = vmatpush1.msra.mxu0 0.0
        %603 = vmatprep.subr.mxu0 0.0
        %604 = vmatpush1.msra.mxu0 0.0
        %605 = vmatprep.subr.mxu0 0.0
        %606 = vmatpush1.msra.mxu0 0.0
        %607 = vmatprep.subr.mxu0 0.0
        %608 = vmatpush1.msra.mxu0 0.0
        %609 = vmatprep.subr.mxu0 0.0
        %610 = vmatpush1.msra.mxu0 0.0
        %611 = vmatprep.subr.mxu0 0.0
        %612 = vmatpush1.msra.mxu0 0.0
        %613 = vmatprep.subr.mxu0 0.0
        %614 = vmatpush1.msra.mxu0 0.0
        %615 = vmatprep.subr.mxu0 0.0
        %616 = vmatpush1.msra.mxu0 0.0
        %617 = vmatprep.subr.mxu0 0.0
        %618 = vmatpush1.msra.mxu0 0.0
        %619 = vmatprep.subr.mxu0 0.0
        %620 = vmatpush1.msra.mxu0 0.0
        %621 = vmatprep.subr.mxu0 0.0
        %622 = vmatpush1.msra.mxu0 0.0
        %623 = vmatprep.subr.mxu0 0.0
        %624 = vmatpush1.msra.mxu0 0.0
        %625 = vmatprep.subr.mxu0 0.0
        %626 = vmatpush1.msra.mxu0 0.0
        %627 = vmatprep.mubr.f32.mxu0 0.0
        %v628 = vand.u32 %v364, 4294901760
        %v629 = vsub.f32 %v364, %v628
        %630 = vmatmul.mubr.f32.gmra.mrb[0].mxu0 %v629
        %v631 = vpop.f32.mrb[0].mxu0
        %v632 = vadd.f32 %v546, %v631
        %v633 = vpop.f32.mrb[0].mxu0
        %634 = vmatprep.mubr.f32.mxu0 0.0
        %v635 = vand.u32 %v367, 4294901760
        %v636 = vsub.f32 %v367, %v635
        %637 = vmatmul.mubr.f32.gmra.mrb[0].mxu0 %v636
        %v638 = vpop.f32.mrb[0].mxu0
        %v639 = vadd.f32 %v552, %v638
        %v640 = vpop.f32.mrb[0].mxu0
        %641 = vdwg.mxu0
        %642 = vmatprep.subr.mxu0 0.0
        %v643 = vand.u32 %v358, 4294901760
        %644 = vmatpush1.msra.mxu0 %v643
        %645 = vmatprep.subr.mxu0 0.0
        %v646 = vand.u32 %v359, 4294901760
        %647 = vmatpush1.msra.mxu0 %v646
        %648 = vmatprep.subr.mxu0 0.0
        %v649 = vand.u32 %v360, 4294901760
        %650 = vmatpush1.msra.mxu0 %v649
        %651 = vmatprep.subr.mxu0 0.0
        %v652 = vand.u32 %v361, 4294901760
        %653 = vmatpush1.msra.mxu0 %v652
        %654 = vmatprep.subr.mxu0 0.0
        %655 = vmatpush1.msra.mxu0 0.0
        %656 = vmatprep.subr.mxu0 0.0
        %657 = vmatpush1.msra.mxu0 0.0
        %658 = vmatprep.subr.mxu0 0.0
        %659 = vmatpush1.msra.mxu0 0.0
        %660 = vmatprep.subr.mxu0 0.0
        %661 = vmatpush1.msra.mxu0 0.0
        %662 = vmatprep.subr.mxu0 0.0
        %663 = vmatpush1.msra.mxu0 0.0
        %664 = vmatprep.subr.mxu0 0.0
        %665 = vmatpush1.msra.mxu0 0.0
        %666 = vmatprep.subr.mxu0 0.0
        %667 = vmatpush1.msra.mxu0 0.0
        %668 = vmatprep.subr.mxu0 0.0
        %669 = vmatpush1.msra.mxu0 0.0
        %670 = vmatprep.subr.mxu0 0.0
        %671 = vmatpush1.msra.mxu0 0.0
        %672 = vmatprep.subr.mxu0 0.0
        %673 = vmatpush1.msra.mxu0 0.0
        %674 = vmatprep.subr.mxu0 0.0
        %675 = vmatpush1.msra.mxu0 0.0
        %676 = vmatprep.subr.mxu0 0.0
        %677 = vmatpush1.msra.mxu0 0.0
        %678 = vmatprep.subr.mxu0 0.0
        %679 = vmatpush1.msra.mxu0 0.0
        %680 = vmatprep.subr.mxu0 0.0
        %681 = vmatpush1.msra.mxu0 0.0
        %682 = vmatprep.subr.mxu0 0.0
        %683 = vmatpush1.msra.mxu0 0.0
        %684 = vmatprep.subr.mxu0 0.0
        %685 = vmatpush1.msra.mxu0 0.0
        %686 = vmatprep.subr.mxu0 0.0
        %687 = vmatpush1.msra.mxu0 0.0
        %688 = vmatprep.subr.mxu0 0.0
        %689 = vmatpush1.msra.mxu0 0.0
        %690 = vmatprep.subr.mxu0 0.0
        %691 = vmatpush1.msra.mxu0 0.0
        %692 = vmatprep.subr.mxu0 0.0
        %693 = vmatpush1.msra.mxu0 0.0
        %694 = vmatprep.subr.mxu0 0.0
        %695 = vmatpush1.msra.mxu0 0.0
        %696 = vmatprep.subr.mxu0 0.0
        %697 = vmatpush1.msra.mxu0 0.0
        %698 = vmatprep.subr.mxu0 0.0
        %699 = vmatpush1.msra.mxu0 0.0
        %700 = vmatprep.subr.mxu0 0.0
        %701 = vmatpush1.msra.mxu0 0.0
        %702 = vmatprep.subr.mxu0 0.0
        %703 = vmatpush1.msra.mxu0 0.0
        %704 = vmatprep.subr.mxu0 0.0
        %705 = vmatpush1.msra.mxu0 0.0
        %706 = vmatprep.subr.mxu0 0.0
        %707 = vmatpush1.msra.mxu0 0.0
        %708 = vmatprep.subr.mxu0 0.0
        %709 = vmatpush1.msra.mxu0 0.0
        %710 = vmatprep.mubr.f32.mxu0 0.0
        %v711 = vand.u32 %v364, 4294901760
        %v712 = vsub.f32 %v364, %v711
        %v713 = vand.u32 %v712, 4294901760
        %714 = vmatmul.mubr.f32.gmra.mrb[0].mxu0 %v713
        %v715 = vpop.f32.mrb[0].mxu0
        %v716 = vadd.f32 %v632, %v715
        %v717 = vpop.f32.mrb[0].mxu0
        %718 = vmatprep.mubr.f32.mxu0 0.0
        %v719 = vand.u32 %v367, 4294901760
        %v720 = vsub.f32 %v367, %v719
        %v721 = vand.u32 %v720, 4294901760
        %722 = vmatmul.mubr.f32.gmra.mrb[0].mxu0 %v721
        %v723 = vpop.f32.mrb[0].mxu0
        %v724 = vadd.f32 %v639, %v723
        %v725 = vpop.f32.mrb[0].mxu0
        %726 = vdwg.mxu0
        %727 = vmatprep.subr.mxu0 0.0
        %v728 = vand.u32 %v358, 4294901760
        %v729 = vsub.f32 %v358, %v728
        %v730 = vand.u32 %v729, 4294901760
        %731 = vmatpush1.msra.mxu0 %v730
        %732 = vmatprep.subr.mxu0 0.0
        %v733 = vand.u32 %v359, 4294901760
        %v734 = vsub.f32 %v359, %v733
        %v735 = vand.u32 %v734, 4294901760
        %736 = vmatpush1.msra.mxu0 %v735
        %737 = vmatprep.subr.mxu0 0.0
        %v738 = vand.u32 %v360, 4294901760
        %v739 = vsub.f32 %v360, %v738
        %v740 = vand.u32 %v739, 4294901760
        %741 = vmatpush1.msra.mxu0 %v740
        %742 = vmatprep.subr.mxu0 0.0
        %v743 = vand.u32 %v361, 4294901760
        %v744 = vsub.f32 %v361, %v743
        %v745 = vand.u32 %v744, 4294901760
        %746 = vmatpush1.msra.mxu0 %v745
        %747 = vmatprep.subr.mxu0 0.0
        %748 = vmatpush1.msra.mxu0 0.0
        %749 = vmatprep.subr.mxu0 0.0
        %750 = vmatpush1.msra.mxu0 0.0
        %751 = vmatprep.subr.mxu0 0.0
        %752 = vmatpush1.msra.mxu0 0.0
        %753 = vmatprep.subr.mxu0 0.0
        %754 = vmatpush1.msra.mxu0 0.0
        %755 = vmatprep.subr.mxu0 0.0
        %756 = vmatpush1.msra.mxu0 0.0
        %757 = vmatprep.subr.mxu0 0.0
        %758 = vmatpush1.msra.mxu0 0.0
        %759 = vmatprep.subr.mxu0 0.0
        %760 = vmatpush1.msra.mxu0 0.0
        %761 = vmatprep.subr.mxu0 0.0
        %762 = vmatpush1.msra.mxu0 0.0
        %763 = vmatprep.subr.mxu0 0.0
        %764 = vmatpush1.msra.mxu0 0.0
        %765 = vmatprep.subr.mxu0 0.0
        %766 = vmatpush1.msra.mxu0 0.0
        %767 = vmatprep.subr.mxu0 0.0
        %768 = vmatpush1.msra.mxu0 0.0
        %769 = vmatprep.subr.mxu0 0.0
        %770 = vmatpush1.msra.mxu0 0.0
        %771 = vmatprep.subr.mxu0 0.0
        %772 = vmatpush1.msra.mxu0 0.0
        %773 = vmatprep.subr.mxu0 0.0
        %774 = vmatpush1.msra.mxu0 0.0
        %775 = vmatprep.subr.mxu0 0.0
        %776 = vmatpush1.msra.mxu0 0.0
        %777 = vmatprep.subr.mxu0 0.0
        %778 = vmatpush1.msra.mxu0 0.0
        %779 = vmatprep.subr.mxu0 0.0
        %780 = vmatpush1.msra.mxu0 0.0
        %781 = vmatprep.subr.mxu0 0.0
        %782 = vmatpush1.msra.mxu0 0.0
        %783 = vmatprep.subr.mxu0 0.0
        %784 = vmatpush1.msra.mxu0 0.0
        %785 = vmatprep.subr.mxu0 0.0
        %786 = vmatpush1.msra.mxu0 0.0
        %787 = vmatprep.subr.mxu0 0.0
        %788 = vmatpush1.msra.mxu0 0.0
        %789 = vmatprep.subr.mxu0 0.0
        %790 = vmatpush1.msra.mxu0 0.0
        %791 = vmatprep.subr.mxu0 0.0
        %792 = vmatpush1.msra.mxu0 0.0
        %793 = vmatprep.subr.mxu0 0.0
        %794 = vmatpush1.msra.mxu0 0.0
        %795 = vmatprep.subr.mxu0 0.0
        %796 = vmatpush1.msra.mxu0 0.0
        %797 = vmatprep.subr.mxu0 0.0
        %798 = vmatpush1.msra.mxu0 0.0
        %799 = vmatprep.subr.mxu0 0.0
        %800 = vmatpush1.msra.mxu0 0.0
        %801 = vmatprep.subr.mxu0 0.0
        %802 = vmatpush1.msra.mxu0 0.0
        %803 = vmatprep.mubr.f32.mxu0 0.0
        %v804 = vand.u32 %v364, 4294901760
        %805 = vmatmul.mubr.f32.gmra.mrb[0].mxu0 %v804
        %v806 = vpop.f32.mrb[0].mxu0
        %v807 = vadd.f32 %v716, %v806
        %v808 = vpop.f32.mrb[0].mxu0
        %809 = vmatprep.mubr.f32.mxu0 0.0
        %v810 = vand.u32 %v367, 4294901760
        %811 = vmatmul.mubr.f32.gmra.mrb[0].mxu0 %v810
        %v812 = vpop.f32.mrb[0].mxu0
        %v813 = vadd.f32 %v724, %v812
        %v814 = vpop.f32.mrb[0].mxu0
        %815 = vdwg.mxu0
        %816 = vmatprep.subr.mxu0 0.0
        %v817 = vand.u32 %v358, 4294901760
        %818 = vmatpush1.msra.mxu0 %v817
        %819 = vmatprep.subr.mxu0 0.0
        %v820 = vand.u32 %v359, 4294901760
        %821 = vmatpush1.msra.mxu0 %v820
        %822 = vmatprep.subr.mxu0 0.0
        %v823 = vand.u32 %v360, 4294901760
        %824 = vmatpush1.msra.mxu0 %v823
        %825 = vmatprep.subr.mxu0 0.0
        %v826 = vand.u32 %v361, 4294901760
        %827 = vmatpush1.msra.mxu0 %v826
        %828 = vmatprep.subr.mxu0 0.0
        %829 = vmatpush1.msra.mxu0 0.0
        %830 = vmatprep.subr.mxu0 0.0
        %831 = vmatpush1.msra.mxu0 0.0
        %832 = vmatprep.subr.mxu0 0.0
        %833 = vmatpush1.msra.mxu0 0.0
        %834 = vmatprep.subr.mxu0 0.0
        %835 = vmatpush1.msra.mxu0 0.0
        %836 = vmatprep.subr.mxu0 0.0
        %837 = vmatpush1.msra.mxu0 0.0
        %838 = vmatprep.subr.mxu0 0.0
        %839 = vmatpush1.msra.mxu0 0.0
        %840 = vmatprep.subr.mxu0 0.0
        %841 = vmatpush1.msra.mxu0 0.0
        %842 = vmatprep.subr.mxu0 0.0
        %843 = vmatpush1.msra.mxu0 0.0
        %844 = vmatprep.subr.mxu0 0.0
        %845 = vmatpush1.msra.mxu0 0.0
        %846 = vmatprep.subr.mxu0 0.0
        %847 = vmatpush1.msra.mxu0 0.0
        %848 = vmatprep.subr.mxu0 0.0
        %849 = vmatpush1.msra.mxu0 0.0
        %850 = vmatprep.subr.mxu0 0.0
        %851 = vmatpush1.msra.mxu0 0.0
        %852 = vmatprep.subr.mxu0 0.0
        %853 = vmatpush1.msra.mxu0 0.0
        %854 = vmatprep.subr.mxu0 0.0
        %855 = vmatpush1.msra.mxu0 0.0
        %856 = vmatprep.subr.mxu0 0.0
        %857 = vmatpush1.msra.mxu0 0.0
        %858 = vmatprep.subr.mxu0 0.0
        %859 = vmatpush1.msra.mxu0 0.0
        %860 = vmatprep.subr.mxu0 0.0
        %861 = vmatpush1.msra.mxu0 0.0
        %862 = vmatprep.subr.mxu0 0.0
        %863 = vmatpush1.msra.mxu0 0.0
        %864 = vmatprep.subr.mxu0 0.0
        %865 = vmatpush1.msra.mxu0 0.0
        %866 = vmatprep.subr.mxu0 0.0
        %867 = vmatpush1.msra.mxu0 0.0
        %868 = vmatprep.subr.mxu0 0.0
        %869 = vmatpush1.msra.mxu0 0.0
        %870 = vmatprep.subr.mxu0 0.0
        %871 = vmatpush1.msra.mxu0 0.0
        %872 = vmatprep.subr.mxu0 0.0
        %873 = vmatpush1.msra.mxu0 0.0
        %874 = vmatprep.subr.mxu0 0.0
        %875 = vmatpush1.msra.mxu0 0.0
        %876 = vmatprep.subr.mxu0 0.0
        %877 = vmatpush1.msra.mxu0 0.0
        %878 = vmatprep.subr.mxu0 0.0
        %879 = vmatpush1.msra.mxu0 0.0
        %880 = vmatprep.subr.mxu0 0.0
        %881 = vmatpush1.msra.mxu0 0.0
        %882 = vmatprep.subr.mxu0 0.0
        %883 = vmatpush1.msra.mxu0 0.0
        %884 = vmatprep.mubr.f32.mxu0 0.0
        %v885 = vand.u32 %v364, 4294901760
        %886 = vmatmul.mubr.f32.gmra.mrb[0].mxu0 %v885
        %v887 = vpop.f32.mrb[0].mxu0
        %v888 = vadd.f32 %v807, %v887
        %v889 = vpop.f32.mrb[0].mxu0
        %890 = vmatprep.mubr.f32.mxu0 0.0
        %v891 = vand.u32 %v367, 4294901760
        %892 = vmatmul.mubr.f32.gmra.mrb[0].mxu0 %v891
        %v893 = vpop.f32.mrb[0].mxu0
        %v894 = vadd.f32 %v813, %v893
        %v895 = vpop.f32.mrb[0].mxu0
        %896 = vdwg.mxu0
        %v898 = vsel %vm362, %v888, 0
        %v901 = vsel %vm362, %v894, 0
        %903 = vmatprep.subr.mxu0 0.0
        %v904 = vand.u32 %v354, 4294901760
        %905 = vmatpush1.msra.mxu0 %v904
        %906 = vmatprep.subr.mxu0 0.0
        %v907 = vand.u32 %v355, 4294901760
        %908 = vmatpush1.msra.mxu0 %v907
        %909 = vmatprep.subr.mxu0 0.0
        %v910 = vand.u32 %v356, 4294901760
        %911 = vmatpush1.msra.mxu0 %v910
        %912 = vmatprep.subr.mxu0 0.0
        %v913 = vand.u32 %v357, 4294901760
        %914 = vmatpush1.msra.mxu0 %v913
        %915 = vmatprep.subr.mxu0 0.0
        %916 = vmatpush1.msra.mxu0 0.0
        %917 = vmatprep.subr.mxu0 0.0
        %918 = vmatpush1.msra.mxu0 0.0
        %919 = vmatprep.subr.mxu0 0.0
        %920 = vmatpush1.msra.mxu0 0.0
        %921 = vmatprep.subr.mxu0 0.0
        %922 = vmatpush1.msra.mxu0 0.0
        %923 = vmatprep.subr.mxu0 0.0
        %924 = vmatpush1.msra.mxu0 0.0
        %925 = vmatprep.subr.mxu0 0.0
        %926 = vmatpush1.msra.mxu0 0.0
        %927 = vmatprep.subr.mxu0 0.0
        %928 = vmatpush1.msra.mxu0 0.0
        %929 = vmatprep.subr.mxu0 0.0
        %930 = vmatpush1.msra.mxu0 0.0
        %931 = vmatprep.subr.mxu0 0.0
        %932 = vmatpush1.msra.mxu0 0.0
        %933 = vmatprep.subr.mxu0 0.0
        %934 = vmatpush1.msra.mxu0 0.0
        %935 = vmatprep.subr.mxu0 0.0
        %936 = vmatpush1.msra.mxu0 0.0
        %937 = vmatprep.subr.mxu0 0.0
        %938 = vmatpush1.msra.mxu0 0.0
        %939 = vmatprep.subr.mxu0 0.0
        %940 = vmatpush1.msra.mxu0 0.0
        %941 = vmatprep.subr.mxu0 0.0
        %942 = vmatpush1.msra.mxu0 0.0
        %943 = vmatprep.subr.mxu0 0.0
        %944 = vmatpush1.msra.mxu0 0.0
        %945 = vmatprep.subr.mxu0 0.0
        %946 = vmatpush1.msra.mxu0 0.0
        %947 = vmatprep.subr.mxu0 0.0
        %948 = vmatpush1.msra.mxu0 0.0
        %949 = vmatprep.subr.mxu0 0.0
        %950 = vmatpush1.msra.mxu0 0.0
        %951 = vmatprep.subr.mxu0 0.0
        %952 = vmatpush1.msra.mxu0 0.0
        %953 = vmatprep.subr.mxu0 0.0
        %954 = vmatpush1.msra.mxu0 0.0
        %955 = vmatprep.subr.mxu0 0.0
        %956 = vmatpush1.msra.mxu0 0.0
        %957 = vmatprep.subr.mxu0 0.0
        %958 = vmatpush1.msra.mxu0 0.0
        %959 = vmatprep.subr.mxu0 0.0
        %960 = vmatpush1.msra.mxu0 0.0
        %961 = vmatprep.subr.mxu0 0.0
        %962 = vmatpush1.msra.mxu0 0.0
        %963 = vmatprep.subr.mxu0 0.0
        %964 = vmatpush1.msra.mxu0 0.0
        %965 = vmatprep.subr.mxu0 0.0
        %966 = vmatpush1.msra.mxu0 0.0
        %967 = vmatprep.subr.mxu0 0.0
        %968 = vmatpush1.msra.mxu0 0.0
        %969 = vmatprep.subr.mxu0 0.0
        %970 = vmatpush1.msra.mxu0 0.0
        %971 = vmatprep.mubr.f32.mxu0 0.0
        %v972 = vand.u32 %v898, 4294901760
        %v973 = vsub.f32 %v898, %v972
        %v974 = vand.u32 %v973, 4294901760
        %v975 = vsub.f32 %v973, %v974
        %v976 = vand.u32 %v975, 4294901760
        %977 = vmatmul.mubr.f32.gmra.mrb[0].mxu0 %v976
        %v978 = vpop.f32.mrb[0].mxu0
        %v979 = vadd.f32 0.0, %v978
        %v980 = vpop.f32.mrb[0].mxu0
        %981 = vmatprep.mubr.f32.mxu0 0.0
        %v982 = vand.u32 %v901, 4294901760
        %v983 = vsub.f32 %v901, %v982
        %v984 = vand.u32 %v983, 4294901760
        %v985 = vsub.f32 %v983, %v984
        %v986 = vand.u32 %v985, 4294901760
        %987 = vmatmul.mubr.f32.gmra.mrb[0].mxu0 %v986
        %v988 = vpop.f32.mrb[0].mxu0
        %v989 = vadd.f32 0.0, %v988
        %v990 = vpop.f32.mrb[0].mxu0
        %991 = vdwg.mxu0
        %992 = vmatprep.subr.mxu0 0.0
        %v993 = vand.u32 %v354, 4294901760
        %v994 = vsub.f32 %v354, %v993
        %v995 = vand.u32 %v994, 4294901760
        %v996 = vsub.f32 %v994, %v995
        %v997 = vand.u32 %v996, 4294901760
        %998 = vmatpush1.msra.mxu0 %v997
        %999 = vmatprep.subr.mxu0 0.0
        %v1000 = vand.u32 %v355, 4294901760
        %v1001 = vsub.f32 %v355, %v1000
        %v1002 = vand.u32 %v1001, 4294901760
        %v1003 = vsub.f32 %v1001, %v1002
        %v1004 = vand.u32 %v1003, 4294901760
        %1005 = vmatpush1.msra.mxu0 %v1004
        %1006 = vmatprep.subr.mxu0 0.0
        %v1007 = vand.u32 %v356, 4294901760
        %v1008 = vsub.f32 %v356, %v1007
        %v1009 = vand.u32 %v1008, 4294901760
        %v1010 = vsub.f32 %v1008, %v1009
        %v1011 = vand.u32 %v1010, 4294901760
        %1012 = vmatpush1.msra.mxu0 %v1011
        %1013 = vmatprep.subr.mxu0 0.0
        %v1014 = vand.u32 %v357, 4294901760
        %v1015 = vsub.f32 %v357, %v1014
        %v1016 = vand.u32 %v1015, 4294901760
        %v1017 = vsub.f32 %v1015, %v1016
        %v1018 = vand.u32 %v1017, 4294901760
        %1019 = vmatpush1.msra.mxu0 %v1018
        %1020 = vmatprep.subr.mxu0 0.0
        %1021 = vmatpush1.msra.mxu0 0.0
        %1022 = vmatprep.subr.mxu0 0.0
        %1023 = vmatpush1.msra.mxu0 0.0
        %1024 = vmatprep.subr.mxu0 0.0
        %1025 = vmatpush1.msra.mxu0 0.0
        %1026 = vmatprep.subr.mxu0 0.0
        %1027 = vmatpush1.msra.mxu0 0.0
        %1028 = vmatprep.subr.mxu0 0.0
        %1029 = vmatpush1.msra.mxu0 0.0
        %1030 = vmatprep.subr.mxu0 0.0
        %1031 = vmatpush1.msra.mxu0 0.0
        %1032 = vmatprep.subr.mxu0 0.0
        %1033 = vmatpush1.msra.mxu0 0.0
        %1034 = vmatprep.subr.mxu0 0.0
        %1035 = vmatpush1.msra.mxu0 0.0
        %1036 = vmatprep.subr.mxu0 0.0
        %1037 = vmatpush1.msra.mxu0 0.0
        %1038 = vmatprep.subr.mxu0 0.0
        %1039 = vmatpush1.msra.mxu0 0.0
        %1040 = vmatprep.subr.mxu0 0.0
        %1041 = vmatpush1.msra.mxu0 0.0
        %1042 = vmatprep.subr.mxu0 0.0
        %1043 = vmatpush1.msra.mxu0 0.0
        %1044 = vmatprep.subr.mxu0 0.0
        %1045 = vmatpush1.msra.mxu0 0.0
        %1046 = vmatprep.subr.mxu0 0.0
        %1047 = vmatpush1.msra.mxu0 0.0
        %1048 = vmatprep.subr.mxu0 0.0
        %1049 = vmatpush1.msra.mxu0 0.0
        %1050 = vmatprep.subr.mxu0 0.0
        %1051 = vmatpush1.msra.mxu0 0.0
        %1052 = vmatprep.subr.mxu0 0.0
        %1053 = vmatpush1.msra.mxu0 0.0
        %1054 = vmatprep.subr.mxu0 0.0
        %1055 = vmatpush1.msra.mxu0 0.0
        %1056 = vmatprep.subr.mxu0 0.0
        %1057 = vmatpush1.msra.mxu0 0.0
        %1058 = vmatprep.subr.mxu0 0.0
        %1059 = vmatpush1.msra.mxu0 0.0
        %1060 = vmatprep.subr.mxu0 0.0
        %1061 = vmatpush1.msra.mxu0 0.0
        %1062 = vmatprep.subr.mxu0 0.0
        %1063 = vmatpush1.msra.mxu0 0.0
        %1064 = vmatprep.subr.mxu0 0.0
        %1065 = vmatpush1.msra.mxu0 0.0
        %1066 = vmatprep.subr.mxu0 0.0
        %1067 = vmatpush1.msra.mxu0 0.0
        %1068 = vmatprep.subr.mxu0 0.0
        %1069 = vmatpush1.msra.mxu0 0.0
        %1070 = vmatprep.subr.mxu0 0.0
        %1071 = vmatpush1.msra.mxu0 0.0
        %1072 = vmatprep.subr.mxu0 0.0
        %1073 = vmatpush1.msra.mxu0 0.0
        %1074 = vmatprep.subr.mxu0 0.0
        %1075 = vmatpush1.msra.mxu0 0.0
        %1076 = vmatprep.mubr.f32.mxu0 0.0
        %v1077 = vand.u32 %v898, 4294901760
        %1078 = vmatmul.mubr.f32.gmra.mrb[0].mxu0 %v1077
        %v1079 = vpop.f32.mrb[0].mxu0
        %v1080 = vadd.f32 %v979, %v1079
        %v1081 = vpop.f32.mrb[0].mxu0
        %1082 = vmatprep.mubr.f32.mxu0 0.0
        %v1083 = vand.u32 %v901, 4294901760
        %1084 = vmatmul.mubr.f32.gmra.mrb[0].mxu0 %v1083
        %v1085 = vpop.f32.mrb[0].mxu0
        %v1086 = vadd.f32 %v989, %v1085
        %v1087 = vpop.f32.mrb[0].mxu0
        %1088 = vdwg.mxu0
        %1089 = vmatprep.subr.mxu0 0.0
        %v1090 = vand.u32 %v354, 4294901760
        %v1091 = vsub.f32 %v354, %v1090
        %1092 = vmatpush1.msra.mxu0 %v1091
        %1093 = vmatprep.subr.mxu0 0.0
        %v1094 = vand.u32 %v355, 4294901760
        %v1095 = vsub.f32 %v355, %v1094
        %1096 = vmatpush1.msra.mxu0 %v1095
        %1097 = vmatprep.subr.mxu0 0.0
        %v1098 = vand.u32 %v356, 4294901760
        %v1099 = vsub.f32 %v356, %v1098
        %1100 = vmatpush1.msra.mxu0 %v1099
        %1101 = vmatprep.subr.mxu0 0.0
        %v1102 = vand.u32 %v357, 4294901760
        %v1103 = vsub.f32 %v357, %v1102
        %1104 = vmatpush1.msra.mxu0 %v1103
        %1105 = vmatprep.subr.mxu0 0.0
        %1106 = vmatpush1.msra.mxu0 0.0
        %1107 = vmatprep.subr.mxu0 0.0
        %1108 = vmatpush1.msra.mxu0 0.0
        %1109 = vmatprep.subr.mxu0 0.0
        %1110 = vmatpush1.msra.mxu0 0.0
        %1111 = vmatprep.subr.mxu0 0.0
        %1112 = vmatpush1.msra.mxu0 0.0
        %1113 = vmatprep.subr.mxu0 0.0
        %1114 = vmatpush1.msra.mxu0 0.0
        %1115 = vmatprep.subr.mxu0 0.0
        %1116 = vmatpush1.msra.mxu0 0.0
        %1117 = vmatprep.subr.mxu0 0.0
        %1118 = vmatpush1.msra.mxu0 0.0
        %1119 = vmatprep.subr.mxu0 0.0
        %1120 = vmatpush1.msra.mxu0 0.0
        %1121 = vmatprep.subr.mxu0 0.0
        %1122 = vmatpush1.msra.mxu0 0.0
        %1123 = vmatprep.subr.mxu0 0.0
        %1124 = vmatpush1.msra.mxu0 0.0
        %1125 = vmatprep.subr.mxu0 0.0
        %1126 = vmatpush1.msra.mxu0 0.0
        %1127 = vmatprep.subr.mxu0 0.0
        %1128 = vmatpush1.msra.mxu0 0.0
        %1129 = vmatprep.subr.mxu0 0.0
        %1130 = vmatpush1.msra.mxu0 0.0
        %1131 = vmatprep.subr.mxu0 0.0
        %1132 = vmatpush1.msra.mxu0 0.0
        %1133 = vmatprep.subr.mxu0 0.0
        %1134 = vmatpush1.msra.mxu0 0.0
        %1135 = vmatprep.subr.mxu0 0.0
        %1136 = vmatpush1.msra.mxu0 0.0
        %1137 = vmatprep.subr.mxu0 0.0
        %1138 = vmatpush1.msra.mxu0 0.0
        %1139 = vmatprep.subr.mxu0 0.0
        %1140 = vmatpush1.msra.mxu0 0.0
        %1141 = vmatprep.subr.mxu0 0.0
        %1142 = vmatpush1.msra.mxu0 0.0
        %1143 = vmatprep.subr.mxu0 0.0
        %1144 = vmatpush1.msra.mxu0 0.0
        %1145 = vmatprep.subr.mxu0 0.0
        %1146 = vmatpush1.msra.mxu0 0.0
        %1147 = vmatprep.subr.mxu0 0.0
        %1148 = vmatpush1.msra.mxu0 0.0
        %1149 = vmatprep.subr.mxu0 0.0
        %1150 = vmatpush1.msra.mxu0 0.0
        %1151 = vmatprep.subr.mxu0 0.0
        %1152 = vmatpush1.msra.mxu0 0.0
        %1153 = vmatprep.subr.mxu0 0.0
        %1154 = vmatpush1.msra.mxu0 0.0
        %1155 = vmatprep.subr.mxu0 0.0
        %1156 = vmatpush1.msra.mxu0 0.0
        %1157 = vmatprep.subr.mxu0 0.0
        %1158 = vmatpush1.msra.mxu0 0.0
        %1159 = vmatprep.subr.mxu0 0.0
        %1160 = vmatpush1.msra.mxu0 0.0
        %1161 = vmatprep.mubr.f32.mxu0 0.0
        %v1162 = vand.u32 %v898, 4294901760
        %v1163 = vsub.f32 %v898, %v1162
        %1164 = vmatmul.mubr.f32.gmra.mrb[0].mxu0 %v1163
        %v1165 = vpop.f32.mrb[0].mxu0
        %v1166 = vadd.f32 %v1080, %v1165
        %v1167 = vpop.f32.mrb[0].mxu0
        %1168 = vmatprep.mubr.f32.mxu0 0.0
        %v1169 = vand.u32 %v901, 4294901760
        %v1170 = vsub.f32 %v901, %v1169
        %1171 = vmatmul.mubr.f32.gmra.mrb[0].mxu0 %v1170
        %v1172 = vpop.f32.mrb[0].mxu0
        %v1173 = vadd.f32 %v1086, %v1172
        %v1174 = vpop.f32.mrb[0].mxu0
        %1175 = vdwg.mxu0
        %1176 = vmatprep.subr.mxu0 0.0
        %v1177 = vand.u32 %v354, 4294901760
        %1178 = vmatpush1.msra.mxu0 %v1177
        %1179 = vmatprep.subr.mxu0 0.0
        %v1180 = vand.u32 %v355, 4294901760
        %1181 = vmatpush1.msra.mxu0 %v1180
        %1182 = vmatprep.subr.mxu0 0.0
        %v1183 = vand.u32 %v356, 4294901760
        %1184 = vmatpush1.msra.mxu0 %v1183
        %1185 = vmatprep.subr.mxu0 0.0
        %v1186 = vand.u32 %v357, 4294901760
        %1187 = vmatpush1.msra.mxu0 %v1186
        %1188 = vmatprep.subr.mxu0 0.0
        %1189 = vmatpush1.msra.mxu0 0.0
        %1190 = vmatprep.subr.mxu0 0.0
        %1191 = vmatpush1.msra.mxu0 0.0
        %1192 = vmatprep.subr.mxu0 0.0
        %1193 = vmatpush1.msra.mxu0 0.0
        %1194 = vmatprep.subr.mxu0 0.0
        %1195 = vmatpush1.msra.mxu0 0.0
        %1196 = vmatprep.subr.mxu0 0.0
        %1197 = vmatpush1.msra.mxu0 0.0
        %1198 = vmatprep.subr.mxu0 0.0
        %1199 = vmatpush1.msra.mxu0 0.0
        %1200 = vmatprep.subr.mxu0 0.0
        %1201 = vmatpush1.msra.mxu0 0.0
        %1202 = vmatprep.subr.mxu0 0.0
        %1203 = vmatpush1.msra.mxu0 0.0
        %1204 = vmatprep.subr.mxu0 0.0
        %1205 = vmatpush1.msra.mxu0 0.0
        %1206 = vmatprep.subr.mxu0 0.0
        %1207 = vmatpush1.msra.mxu0 0.0
        %1208 = vmatprep.subr.mxu0 0.0
        %1209 = vmatpush1.msra.mxu0 0.0
        %1210 = vmatprep.subr.mxu0 0.0
        %1211 = vmatpush1.msra.mxu0 0.0
        %1212 = vmatprep.subr.mxu0 0.0
        %1213 = vmatpush1.msra.mxu0 0.0
        %1214 = vmatprep.subr.mxu0 0.0
        %1215 = vmatpush1.msra.mxu0 0.0
        %1216 = vmatprep.subr.mxu0 0.0
        %1217 = vmatpush1.msra.mxu0 0.0
        %1218 = vmatprep.subr.mxu0 0.0
        %1219 = vmatpush1.msra.mxu0 0.0
        %1220 = vmatprep.subr.mxu0 0.0
        %1221 = vmatpush1.msra.mxu0 0.0
        %1222 = vmatprep.subr.mxu0 0.0
        %1223 = vmatpush1.msra.mxu0 0.0
        %1224 = vmatprep.subr.mxu0 0.0
        %1225 = vmatpush1.msra.mxu0 0.0
        %1226 = vmatprep.subr.mxu0 0.0
        %1227 = vmatpush1.msra.mxu0 0.0
        %1228 = vmatprep.subr.mxu0 0.0
        %1229 = vmatpush1.msra.mxu0 0.0
        %1230 = vmatprep.subr.mxu0 0.0
        %1231 = vmatpush1.msra.mxu0 0.0
        %1232 = vmatprep.subr.mxu0 0.0
        %1233 = vmatpush1.msra.mxu0 0.0
        %1234 = vmatprep.subr.mxu0 0.0
        %1235 = vmatpush1.msra.mxu0 0.0
        %1236 = vmatprep.subr.mxu0 0.0
        %1237 = vmatpush1.msra.mxu0 0.0
        %1238 = vmatprep.subr.mxu0 0.0
        %1239 = vmatpush1.msra.mxu0 0.0
        %1240 = vmatprep.subr.mxu0 0.0
        %1241 = vmatpush1.msra.mxu0 0.0
        %1242 = vmatprep.subr.mxu0 0.0
        %1243 = vmatpush1.msra.mxu0 0.0
        %1244 = vmatprep.mubr.f32.mxu0 0.0
        %v1245 = vand.u32 %v898, 4294901760
        %v1246 = vsub.f32 %v898, %v1245
        %v1247 = vand.u32 %v1246, 4294901760
        %1248 = vmatmul.mubr.f32.gmra.mrb[0].mxu0 %v1247
        %v1249 = vpop.f32.mrb[0].mxu0
        %v1250 = vadd.f32 %v1166, %v1249
        %v1251 = vpop.f32.mrb[0].mxu0
        %1252 = vmatprep.mubr.f32.mxu0 0.0
        %v1253 = vand.u32 %v901, 4294901760
        %v1254 = vsub.f32 %v901, %v1253
        %v1255 = vand.u32 %v1254, 4294901760
        %1256 = vmatmul.mubr.f32.gmra.mrb[0].mxu0 %v1255
        %v1257 = vpop.f32.mrb[0].mxu0
        %v1258 = vadd.f32 %v1173, %v1257
        %v1259 = vpop.f32.mrb[0].mxu0
        %1260 = vdwg.mxu0
        %1261 = vmatprep.subr.mxu0 0.0
        %v1262 = vand.u32 %v354, 4294901760
        %v1263 = vsub.f32 %v354, %v1262
        %v1264 = vand.u32 %v1263, 4294901760
        %1265 = vmatpush1.msra.mxu0 %v1264
        %1266 = vmatprep.subr.mxu0 0.0
        %v1267 = vand.u32 %v355, 4294901760
        %v1268 = vsub.f32 %v355, %v1267
        %v1269 = vand.u32 %v1268, 4294901760
        %1270 = vmatpush1.msra.mxu0 %v1269
        %1271 = vmatprep.subr.mxu0 0.0
        %v1272 = vand.u32 %v356, 4294901760
        %v1273 = vsub.f32 %v356, %v1272
        %v1274 = vand.u32 %v1273, 4294901760
        %1275 = vmatpush1.msra.mxu0 %v1274
        %1276 = vmatprep.subr.mxu0 0.0
        %v1277 = vand.u32 %v357, 4294901760
        %v1278 = vsub.f32 %v357, %v1277
        %v1279 = vand.u32 %v1278, 4294901760
        %1280 = vmatpush1.msra.mxu0 %v1279
        %1281 = vmatprep.subr.mxu0 0.0
        %1282 = vmatpush1.msra.mxu0 0.0
        %1283 = vmatprep.subr.mxu0 0.0
        %1284 = vmatpush1.msra.mxu0 0.0
        %1285 = vmatprep.subr.mxu0 0.0
        %1286 = vmatpush1.msra.mxu0 0.0
        %1287 = vmatprep.subr.mxu0 0.0
        %1288 = vmatpush1.msra.mxu0 0.0
        %1289 = vmatprep.subr.mxu0 0.0
        %1290 = vmatpush1.msra.mxu0 0.0
        %1291 = vmatprep.subr.mxu0 0.0
        %1292 = vmatpush1.msra.mxu0 0.0
        %1293 = vmatprep.subr.mxu0 0.0
        %1294 = vmatpush1.msra.mxu0 0.0
        %1295 = vmatprep.subr.mxu0 0.0
        %1296 = vmatpush1.msra.mxu0 0.0
        %1297 = vmatprep.subr.mxu0 0.0
        %1298 = vmatpush1.msra.mxu0 0.0
        %1299 = vmatprep.subr.mxu0 0.0
        %1300 = vmatpush1.msra.mxu0 0.0
        %1301 = vmatprep.subr.mxu0 0.0
        %1302 = vmatpush1.msra.mxu0 0.0
        %1303 = vmatprep.subr.mxu0 0.0
        %1304 = vmatpush1.msra.mxu0 0.0
        %1305 = vmatprep.subr.mxu0 0.0
        %1306 = vmatpush1.msra.mxu0 0.0
        %1307 = vmatprep.subr.mxu0 0.0
        %1308 = vmatpush1.msra.mxu0 0.0
        %1309 = vmatprep.subr.mxu0 0.0
        %1310 = vmatpush1.msra.mxu0 0.0
        %1311 = vmatprep.subr.mxu0 0.0
        %1312 = vmatpush1.msra.mxu0 0.0
        %1313 = vmatprep.subr.mxu0 0.0
        %1314 = vmatpush1.msra.mxu0 0.0
        %1315 = vmatprep.subr.mxu0 0.0
        %1316 = vmatpush1.msra.mxu0 0.0
        %1317 = vmatprep.subr.mxu0 0.0
        %1318 = vmatpush1.msra.mxu0 0.0
        %1319 = vmatprep.subr.mxu0 0.0
        %1320 = vmatpush1.msra.mxu0 0.0
        %1321 = vmatprep.subr.mxu0 0.0
        %1322 = vmatpush1.msra.mxu0 0.0
        %1323 = vmatprep.subr.mxu0 0.0
        %1324 = vmatpush1.msra.mxu0 0.0
        %1325 = vmatprep.subr.mxu0 0.0
        %1326 = vmatpush1.msra.mxu0 0.0
        %1327 = vmatprep.subr.mxu0 0.0
        %1328 = vmatpush1.msra.mxu0 0.0
        %1329 = vmatprep.subr.mxu0 0.0
        %1330 = vmatpush1.msra.mxu0 0.0
        %1331 = vmatprep.subr.mxu0 0.0
        %1332 = vmatpush1.msra.mxu0 0.0
        %1333 = vmatprep.subr.mxu0 0.0
        %1334 = vmatpush1.msra.mxu0 0.0
        %1335 = vmatprep.subr.mxu0 0.0
        %1336 = vmatpush1.msra.mxu0 0.0
        %1337 = vmatprep.mubr.f32.mxu0 0.0
        %v1338 = vand.u32 %v898, 4294901760
        %1339 = vmatmul.mubr.f32.gmra.mrb[0].mxu0 %v1338
        %v1340 = vpop.f32.mrb[0].mxu0
        %v1341 = vadd.f32 %v1250, %v1340
        %v1342 = vpop.f32.mrb[0].mxu0
        %1343 = vmatprep.mubr.f32.mxu0 0.0
        %v1344 = vand.u32 %v901, 4294901760
        %1345 = vmatmul.mubr.f32.gmra.mrb[0].mxu0 %v1344
        %v1346 = vpop.f32.mrb[0].mxu0
        %v1347 = vadd.f32 %v1258, %v1346
        %v1348 = vpop.f32.mrb[0].mxu0
        %1349 = vdwg.mxu0
        %1350 = vmatprep.subr.mxu0 0.0
        %v1351 = vand.u32 %v354, 4294901760
        %1352 = vmatpush1.msra.mxu0 %v1351
        %1353 = vmatprep.subr.mxu0 0.0
        %v1354 = vand.u32 %v355, 4294901760
        %1355 = vmatpush1.msra.mxu0 %v1354
        %1356 = vmatprep.subr.mxu0 0.0
        %v1357 = vand.u32 %v356, 4294901760
        %1358 = vmatpush1.msra.mxu0 %v1357
        %1359 = vmatprep.subr.mxu0 0.0
        %v1360 = vand.u32 %v357, 4294901760
        %1361 = vmatpush1.msra.mxu0 %v1360
        %1362 = vmatprep.subr.mxu0 0.0
        %1363 = vmatpush1.msra.mxu0 0.0
        %1364 = vmatprep.subr.mxu0 0.0
        %1365 = vmatpush1.msra.mxu0 0.0
        %1366 = vmatprep.subr.mxu0 0.0
        %1367 = vmatpush1.msra.mxu0 0.0
        %1368 = vmatprep.subr.mxu0 0.0
        %1369 = vmatpush1.msra.mxu0 0.0
        %1370 = vmatprep.subr.mxu0 0.0
        %1371 = vmatpush1.msra.mxu0 0.0
        %1372 = vmatprep.subr.mxu0 0.0
        %1373 = vmatpush1.msra.mxu0 0.0
        %1374 = vmatprep.subr.mxu0 0.0
        %1375 = vmatpush1.msra.mxu0 0.0
        %1376 = vmatprep.subr.mxu0 0.0
        %1377 = vmatpush1.msra.mxu0 0.0
        %1378 = vmatprep.subr.mxu0 0.0
        %1379 = vmatpush1.msra.mxu0 0.0
        %1380 = vmatprep.subr.mxu0 0.0
        %1381 = vmatpush1.msra.mxu0 0.0
        %1382 = vmatprep.subr.mxu0 0.0
        %1383 = vmatpush1.msra.mxu0 0.0
        %1384 = vmatprep.subr.mxu0 0.0
        %1385 = vmatpush1.msra.mxu0 0.0
        %1386 = vmatprep.subr.mxu0 0.0
        %1387 = vmatpush1.msra.mxu0 0.0
        %1388 = vmatprep.subr.mxu0 0.0
        %1389 = vmatpush1.msra.mxu0 0.0
        %1390 = vmatprep.subr.mxu0 0.0
        %1391 = vmatpush1.msra.mxu0 0.0
        %1392 = vmatprep.subr.mxu0 0.0
        %1393 = vmatpush1.msra.mxu0 0.0
        %1394 = vmatprep.subr.mxu0 0.0
        %1395 = vmatpush1.msra.mxu0 0.0
        %1396 = vmatprep.subr.mxu0 0.0
        %1397 = vmatpush1.msra.mxu0 0.0
        %1398 = vmatprep.subr.mxu0 0.0
        %1399 = vmatpush1.msra.mxu0 0.0
        %1400 = vmatprep.subr.mxu0 0.0
        %1401 = vmatpush1.msra.mxu0 0.0
        %1402 = vmatprep.subr.mxu0 0.0
        %1403 = vmatpush1.msra.mxu0 0.0
        %1404 = vmatprep.subr.mxu0 0.0
        %1405 = vmatpush1.msra.mxu0 0.0
        %1406 = vmatprep.subr.mxu0 0.0
        %1407 = vmatpush1.msra.mxu0 0.0
        %1408 = vmatprep.subr.mxu0 0.0
        %1409 = vmatpush1.msra.mxu0 0.0
        %1410 = vmatprep.subr.mxu0 0.0
        %1411 = vmatpush1.msra.mxu0 0.0
        %1412 = vmatprep.subr.mxu0 0.0
        %1413 = vmatpush1.msra.mxu0 0.0
        %1414 = vmatprep.subr.mxu0 0.0
        %1415 = vmatpush1.msra.mxu0 0.0
        %1416 = vmatprep.subr.mxu0 0.0
        %1417 = vmatpush1.msra.mxu0 0.0
        %1418 = vmatprep.mubr.f32.mxu0 0.0
        %v1419 = vand.u32 %v898, 4294901760
        %1420 = vmatmul.mubr.f32.gmra.mrb[0].mxu0 %v1419
        %v1421 = vpop.f32.mrb[0].mxu0
        %v1422 = vadd.f32 %v1341, %v1421
        %v1423 = vpop.f32.mrb[0].mxu0
        %1424 = vmatprep.mubr.f32.mxu0 0.0
        %v1425 = vand.u32 %v901, 4294901760
        %1426 = vmatmul.mubr.f32.gmra.mrb[0].mxu0 %v1425
        %v1427 = vpop.f32.mrb[0].mxu0
        %v1428 = vadd.f32 %v1347, %v1427
        %v1429 = vpop.f32.mrb[0].mxu0
        %1430 = vdwg.mxu0
        %v1431 = vld [vmem:[#allocation2] sm:$0x3]
        %v1432 = vmul.f32 %v344, %v1422
        %v1433 = vmul.f32 %v345, %v1428
        %v1434 = vmul.f32 %v346, %v1422
        %v1435 = vmul.f32 %v347, %v1428
        %v1436 = vsel %vm323, %v1432, 0.0
        %v1437 = vsel %vm323, %v1433, 0.0
        %v1438 = vadd.f32 %v1436, %v1437
        %v1439 = vrot.slane %v1438, 4
        %v1440 = vadd.f32 %v1438, %v1439
        %v1441 = vrot.slane %v1440, 2
        %v1442 = vadd.f32 %v1440, %v1441
        %v1443 = vrot.slane %v1442, 1
        %v1444 = vadd.f32 %v1442, %v1443
        %v1445 = vsel %vm323, %v1434, 0.0
        %v1446 = vsel %vm323, %v1435, 0.0
        %v1447 = vadd.f32 %v1445, %v1446
        %v1448 = vrot.slane %v1447, 4
        %v1449 = vadd.f32 %v1447, %v1448
        %v1450 = vrot.slane %v1449, 2
        %v1451 = vadd.f32 %v1449, %v1450
        %v1452 = vrot.slane %v1451, 1
        %v1453 = vadd.f32 %v1451, %v1452
        %vm1456 = vcmask 1041409
        %v1457 = vsel %vm1456, %v1453, %v1444
        %v1459 = vadd.f32 %v1431, %v1457
        %vm1460 = vcmask 123904
        %1461 = vst.msk [vmem:[#allocation2] sm:$0x3] %vm1460, %v1459
        %v1462 = vld [vmem:[#allocation3] sm:$0x1]
        %v1463 = vsel %vm323, %v1422, 0.0
        %v1464 = vsel %vm323, %v1428, 0.0
        %v1465 = vadd.f32 %v1463, %v1464
        %v1466 = vrot.slane %v1465, 4
        %v1467 = vadd.f32 %v1465, %v1466
        %v1468 = vrot.slane %v1467, 2
        %v1469 = vadd.f32 %v1467, %v1468
        %v1470 = vrot.slane %v1469, 1
        %v1471 = vadd.f32 %v1469, %v1470
        %v1472 = vadd.f32 %v1462, %v1471
        %vm1473 = vcmask 122880
        %1474 = vst.msk [vmem:[#allocation3] sm:$0x1] %vm1473, %v1472
        %s1475 = scalar_lea.vmem [#allocation7], 32
        %v1476 = vld [vmem:[%s1475] sm:$0xff]
        %v1477 = vld [vmem:[%s1475 + $0x8] sm:$0xff]
        %v1478 = vld [vmem:[%s1475 + $0x10] sm:$0xff]
        %v1479 = vld [vmem:[%s1475 + $0x18] sm:$0xff]
        %1480 = vmatprep.subr.mxu0 0.0
        %v1481 = vand.u32 %v1476, 4294901760
        %1482 = vmatpush1.msra.mxu0 %v1481
        %1483 = vmatprep.subr.mxu0 0.0
        %v1484 = vand.u32 %v1477, 4294901760
        %1485 = vmatpush1.msra.mxu0 %v1484
        %1486 = vmatprep.subr.mxu0 0.0
        %v1487 = vand.u32 %v1478, 4294901760
        %1488 = vmatpush1.msra.mxu0 %v1487
        %1489 = vmatprep.subr.mxu0 0.0
        %v1490 = vand.u32 %v1479, 4294901760
        %1491 = vmatpush1.msra.mxu0 %v1490
        %1492 = vmatprep.subr.mxu0 0.0
        %1493 = vmatpush1.msra.mxu0 0.0
        %1494 = vmatprep.subr.mxu0 0.0
        %1495 = vmatpush1.msra.mxu0 0.0
        %1496 = vmatprep.subr.mxu0 0.0
        %1497 = vmatpush1.msra.mxu0 0.0
        %1498 = vmatprep.subr.mxu0 0.0
        %1499 = vmatpush1.msra.mxu0 0.0
        %1500 = vmatprep.subr.mxu0 0.0
        %1501 = vmatpush1.msra.mxu0 0.0
        %1502 = vmatprep.subr.mxu0 0.0
        %1503 = vmatpush1.msra.mxu0 0.0
        %1504 = vmatprep.subr.mxu0 0.0
        %1505 = vmatpush1.msra.mxu0 0.0
        %1506 = vmatprep.subr.mxu0 0.0
        %1507 = vmatpush1.msra.mxu0 0.0
        %1508 = vmatprep.subr.mxu0 0.0
        %1509 = vmatpush1.msra.mxu0 0.0
        %1510 = vmatprep.subr.mxu0 0.0
        %1511 = vmatpush1.msra.mxu0 0.0
        %1512 = vmatprep.subr.mxu0 0.0
        %1513 = vmatpush1.msra.mxu0 0.0
        %1514 = vmatprep.subr.mxu0 0.0
        %1515 = vmatpush1.msra.mxu0 0.0
        %1516 = vmatprep.subr.mxu0 0.0
        %1517 = vmatpush1.msra.mxu0 0.0
        %1518 = vmatprep.subr.mxu0 0.0
        %1519 = vmatpush1.msra.mxu0 0.0
        %1520 = vmatprep.subr.mxu0 0.0
        %1521 = vmatpush1.msra.mxu0 0.0
        %1522 = vmatprep.subr.mxu0 0.0
        %1523 = vmatpush1.msra.mxu0 0.0
        %1524 = vmatprep.subr.mxu0 0.0
        %1525 = vmatpush1.msra.mxu0 0.0
        %1526 = vmatprep.subr.mxu0 0.0
        %1527 = vmatpush1.msra.mxu0 0.0
        %1528 = vmatprep.subr.mxu0 0.0
        %1529 = vmatpush1.msra.mxu0 0.0
        %1530 = vmatprep.subr.mxu0 0.0
        %1531 = vmatpush1.msra.mxu0 0.0
        %1532 = vmatprep.subr.mxu0 0.0
        %1533 = vmatpush1.msra.mxu0 0.0
        %1534 = vmatprep.subr.mxu0 0.0
        %1535 = vmatpush1.msra.mxu0 0.0
        %1536 = vmatprep.subr.mxu0 0.0
        %1537 = vmatpush1.msra.mxu0 0.0
        %1538 = vmatprep.subr.mxu0 0.0
        %1539 = vmatpush1.msra.mxu0 0.0
        %1540 = vmatprep.subr.mxu0 0.0
        %1541 = vmatpush1.msra.mxu0 0.0
        %1542 = vmatprep.subr.mxu0 0.0
        %1543 = vmatpush1.msra.mxu0 0.0
        %1544 = vmatprep.subr.mxu0 0.0
        %1545 = vmatpush1.msra.mxu0 0.0
        %1546 = vmatprep.subr.mxu0 0.0
        %1547 = vmatpush1.msra.mxu0 0.0
        %1548 = vmatprep.mubr.f32.mxu0 0.0
        %v1549 = vand.u32 %v364, 4294901760
        %v1550 = vsub.f32 %v364, %v1549
        %v1551 = vand.u32 %v1550, 4294901760
        %v1552 = vsub.f32 %v1550, %v1551
        %v1553 = vand.u32 %v1552, 4294901760
        %1554 = vmatmul.mubr.f32.gmra.mrb[0].mxu0 %v1553
        %v1555 = vpop.f32.mrb[0].mxu0
        %v1556 = vadd.f32 0.0, %v1555
        %v1557 = vpop.f32.mrb[0].mxu0
        %1558 = vmatprep.mubr.f32.mxu0 0.0
        %v1559 = vand.u32 %v367, 4294901760
        %v1560 = vsub.f32 %v367, %v1559
        %v1561 = vand.u32 %v1560, 4294901760
        %v1562 = vsub.f32 %v1560, %v1561
        %v1563 = vand.u32 %v1562, 4294901760
        %1564 = vmatmul.mubr.f32.gmra.mrb[0].mxu0 %v1563
        %v1565 = vpop.f32.mrb[0].mxu0
        %v1566 = vadd.f32 0.0, %v1565
        %v1567 = vpop.f32.mrb[0].mxu0
        %1568 = vdwg.mxu0
        %1569 = vmatprep.subr.mxu0 0.0
        %v1570 = vand.u32 %v1476, 4294901760
        %v1571 = vsub.f32 %v1476, %v1570
        %v1572 = vand.u32 %v1571, 4294901760
        %v1573 = vsub.f32 %v1571, %v1572
        %v1574 = vand.u32 %v1573, 4294901760
        %1575 = vmatpush1.msra.mxu0 %v1574
        %1576 = vmatprep.subr.mxu0 0.0
        %v1577 = vand.u32 %v1477, 4294901760
        %v1578 = vsub.f32 %v1477, %v1577
        %v1579 = vand.u32 %v1578, 4294901760
        %v1580 = vsub.f32 %v1578, %v1579
        %v1581 = vand.u32 %v1580, 4294901760
        %1582 = vmatpush1.msra.mxu0 %v1581
        %1583 = vmatprep.subr.mxu0 0.0
        %v1584 = vand.u32 %v1478, 4294901760
        %v1585 = vsub.f32 %v1478, %v1584
        %v1586 = vand.u32 %v1585, 4294901760
        %v1587 = vsub.f32 %v1585, %v1586
        %v1588 = vand.u32 %v1587, 4294901760
        %1589 = vmatpush1.msra.mxu0 %v1588
        %1590 = vmatprep.subr.mxu0 0.0
        %v1591 = vand.u32 %v1479, 4294901760
        %v1592 = vsub.f32 %v1479, %v1591
        %v1593 = vand.u32 %v1592, 4294901760
        %v1594 = vsub.f32 %v1592, %v1593
        %v1595 = vand.u32 %v1594, 4294901760
        %1596 = vmatpush1.msra.mxu0 %v1595
        %1597 = vmatprep.subr.mxu0 0.0
        %1598 = vmatpush1.msra.mxu0 0.0
        %1599 = vmatprep.subr.mxu0 0.0
        %1600 = vmatpush1.msra.mxu0 0.0
        %1601 = vmatprep.subr.mxu0 0.0
        %1602 = vmatpush1.msra.mxu0 0.0
        %1603 = vmatprep.subr.mxu0 0.0
        %1604 = vmatpush1.msra.mxu0 0.0
        %1605 = vmatprep.subr.mxu0 0.0
        %1606 = vmatpush1.msra.mxu0 0.0
        %1607 = vmatprep.subr.mxu0 0.0
        %1608 = vmatpush1.msra.mxu0 0.0
        %1609 = vmatprep.subr.mxu0 0.0
        %1610 = vmatpush1.msra.mxu0 0.0
        %1611 = vmatprep.subr.mxu0 0.0
        %1612 = vmatpush1.msra.mxu0 0.0
        %1613 = vmatprep.subr.mxu0 0.0
        %1614 = vmatpush1.msra.mxu0 0.0
        %1615 = vmatprep.subr.mxu0 0.0
        %1616 = vmatpush1.msra.mxu0 0.0
        %1617 = vmatprep.subr.mxu0 0.0
        %1618 = vmatpush1.msra.mxu0 0.0
        %1619 = vmatprep.subr.mxu0 0.0
        %1620 = vmatpush1.msra.mxu0 0.0
        %1621 = vmatprep.subr.mxu0 0.0
        %1622 = vmatpush1.msra.mxu0 0.0
        %1623 = vmatprep.subr.mxu0 0.0
        %1624 = vmatpush1.msra.mxu0 0.0
        %1625 = vmatprep.subr.mxu0 0.0
        %1626 = vmatpush1.msra.mxu0 0.0
        %1627 = vmatprep.subr.mxu0 0.0
        %1628 = vmatpush1.msra.mxu0 0.0
        %1629 = vmatprep.subr.mxu0 0.0
        %1630 = vmatpush1.msra.mxu0 0.0
        %1631 = vmatprep.subr.mxu0 0.0
        %1632 = vmatpush1.msra.mxu0 0.0
        %1633 = vmatprep.subr.mxu0 0.0
        %1634 = vmatpush1.msra.mxu0 0.0
        %1635 = vmatprep.subr.mxu0 0.0
        %1636 = vmatpush1.msra.mxu0 0.0
        %1637 = vmatprep.subr.mxu0 0.0
        %1638 = vmatpush1.msra.mxu0 0.0
        %1639 = vmatprep.subr.mxu0 0.0
        %1640 = vmatpush1.msra.mxu0 0.0
        %1641 = vmatprep.subr.mxu0 0.0
        %1642 = vmatpush1.msra.mxu0 0.0
        %1643 = vmatprep.subr.mxu0 0.0
        %1644 = vmatpush1.msra.mxu0 0.0
        %1645 = vmatprep.subr.mxu0 0.0
        %1646 = vmatpush1.msra.mxu0 0.0
        %1647 = vmatprep.subr.mxu0 0.0
        %1648 = vmatpush1.msra.mxu0 0.0
        %1649 = vmatprep.subr.mxu0 0.0
        %1650 = vmatpush1.msra.mxu0 0.0
        %1651 = vmatprep.subr.mxu0 0.0
        %1652 = vmatpush1.msra.mxu0 0.0
        %1653 = vmatprep.mubr.f32.mxu0 0.0
        %v1654 = vand.u32 %v364, 4294901760
        %1655 = vmatmul.mubr.f32.gmra.mrb[0].mxu0 %v1654
        %v1656 = vpop.f32.mrb[0].mxu0
        %v1657 = vadd.f32 %v1556, %v1656
        %v1658 = vpop.f32.mrb[0].mxu0
        %1659 = vmatprep.mubr.f32.mxu0 0.0
        %v1660 = vand.u32 %v367, 4294901760
        %1661 = vmatmul.mubr.f32.gmra.mrb[0].mxu0 %v1660
        %v1662 = vpop.f32.mrb[0].mxu0
        %v1663 = vadd.f32 %v1566, %v1662
        %v1664 = vpop.f32.mrb[0].mxu0
        %1665 = vdwg.mxu0
        %1666 = vmatprep.subr.mxu0 0.0
        %v1667 = vand.u32 %v1476, 4294901760
        %v1668 = vsub.f32 %v1476, %v1667
        %1669 = vmatpush1.msra.mxu0 %v1668
        %1670 = vmatprep.subr.mxu0 0.0
        %v1671 = vand.u32 %v1477, 4294901760
        %v1672 = vsub.f32 %v1477, %v1671
        %1673 = vmatpush1.msra.mxu0 %v1672
        %1674 = vmatprep.subr.mxu0 0.0
        %v1675 = vand.u32 %v1478, 4294901760
        %v1676 = vsub.f32 %v1478, %v1675
        %1677 = vmatpush1.msra.mxu0 %v1676
        %1678 = vmatprep.subr.mxu0 0.0
        %v1679 = vand.u32 %v1479, 4294901760
        %v1680 = vsub.f32 %v1479, %v1679
        %1681 = vmatpush1.msra.mxu0 %v1680
        %1682 = vmatprep.subr.mxu0 0.0
        %1683 = vmatpush1.msra.mxu0 0.0
        %1684 = vmatprep.subr.mxu0 0.0
        %1685 = vmatpush1.msra.mxu0 0.0
        %1686 = vmatprep.subr.mxu0 0.0
        %1687 = vmatpush1.msra.mxu0 0.0
        %1688 = vmatprep.subr.mxu0 0.0
        %1689 = vmatpush1.msra.mxu0 0.0
        %1690 = vmatprep.subr.mxu0 0.0
        %1691 = vmatpush1.msra.mxu0 0.0
        %1692 = vmatprep.subr.mxu0 0.0
        %1693 = vmatpush1.msra.mxu0 0.0
        %1694 = vmatprep.subr.mxu0 0.0
        %1695 = vmatpush1.msra.mxu0 0.0
        %1696 = vmatprep.subr.mxu0 0.0
        %1697 = vmatpush1.msra.mxu0 0.0
        %1698 = vmatprep.subr.mxu0 0.0
        %1699 = vmatpush1.msra.mxu0 0.0
        %1700 = vmatprep.subr.mxu0 0.0
        %1701 = vmatpush1.msra.mxu0 0.0
        %1702 = vmatprep.subr.mxu0 0.0
        %1703 = vmatpush1.msra.mxu0 0.0
        %1704 = vmatprep.subr.mxu0 0.0
        %1705 = vmatpush1.msra.mxu0 0.0
        %1706 = vmatprep.subr.mxu0 0.0
        %1707 = vmatpush1.msra.mxu0 0.0
        %1708 = vmatprep.subr.mxu0 0.0
        %1709 = vmatpush1.msra.mxu0 0.0
        %1710 = vmatprep.subr.mxu0 0.0
        %1711 = vmatpush1.msra.mxu0 0.0
        %1712 = vmatprep.subr.mxu0 0.0
        %1713 = vmatpush1.msra.mxu0 0.0
        %1714 = vmatprep.subr.mxu0 0.0
        %1715 = vmatpush1.msra.mxu0 0.0
        %1716 = vmatprep.subr.mxu0 0.0
        %1717 = vmatpush1.msra.mxu0 0.0
        %1718 = vmatprep.subr.mxu0 0.0
        %1719 = vmatpush1.msra.mxu0 0.0
        %1720 = vmatprep.subr.mxu0 0.0
        %1721 = vmatpush1.msra.mxu0 0.0
        %1722 = vmatprep.subr.mxu0 0.0
        %1723 = vmatpush1.msra.mxu0 0.0
        %1724 = vmatprep.subr.mxu0 0.0
        %1725 = vmatpush1.msra.mxu0 0.0
        %1726 = vmatprep.subr.mxu0 0.0
        %1727 = vmatpush1.msra.mxu0 0.0
        %1728 = vmatprep.subr.mxu0 0.0
        %1729 = vmatpush1.msra.mxu0 0.0
        %1730 = vmatprep.subr.mxu0 0.0
        %1731 = vmatpush1.msra.mxu0 0.0
        %1732 = vmatprep.subr.mxu0 0.0
        %1733 = vmatpush1.msra.mxu0 0.0
        %1734 = vmatprep.subr.mxu0 0.0
        %1735 = vmatpush1.msra.mxu0 0.0
        %1736 = vmatprep.subr.mxu0 0.0
        %1737 = vmatpush1.msra.mxu0 0.0
        %1738 = vmatprep.mubr.f32.mxu0 0.0
        %v1739 = vand.u32 %v364, 4294901760
        %v1740 = vsub.f32 %v364, %v1739
        %1741 = vmatmul.mubr.f32.gmra.mrb[0].mxu0 %v1740
        %v1742 = vpop.f32.mrb[0].mxu0
        %v1743 = vadd.f32 %v1657, %v1742
        %v1744 = vpop.f32.mrb[0].mxu0
        %1745 = vmatprep.mubr.f32.mxu0 0.0
        %v1746 = vand.u32 %v367, 4294901760
        %v1747 = vsub.f32 %v367, %v1746
        %1748 = vmatmul.mubr.f32.gmra.mrb[0].mxu0 %v1747
        %v1749 = vpop.f32.mrb[0].mxu0
        %v1750 = vadd.f32 %v1663, %v1749
        %v1751 = vpop.f32.mrb[0].mxu0
        %1752 = vdwg.mxu0
        %1753 = vmatprep.subr.mxu0 0.0
        %v1754 = vand.u32 %v1476, 4294901760
        %1755 = vmatpush1.msra.mxu0 %v1754
        %1756 = vmatprep.subr.mxu0 0.0
        %v1757 = vand.u32 %v1477, 4294901760
        %1758 = vmatpush1.msra.mxu0 %v1757
        %1759 = vmatprep.subr.mxu0 0.0
        %v1760 = vand.u32 %v1478, 4294901760
        %1761 = vmatpush1.msra.mxu0 %v1760
        %1762 = vmatprep.subr.mxu0 0.0
        %v1763 = vand.u32 %v1479, 4294901760
        %1764 = vmatpush1.msra.mxu0 %v1763
        %1765 = vmatprep.subr.mxu0 0.0
        %1766 = vmatpush1.msra.mxu0 0.0
        %1767 = vmatprep.subr.mxu0 0.0
        %1768 = vmatpush1.msra.mxu0 0.0
        %1769 = vmatprep.subr.mxu0 0.0
        %1770 = vmatpush1.msra.mxu0 0.0
        %1771 = vmatprep.subr.mxu0 0.0
        %1772 = vmatpush1.msra.mxu0 0.0
        %1773 = vmatprep.subr.mxu0 0.0
        %1774 = vmatpush1.msra.mxu0 0.0
        %1775 = vmatprep.subr.mxu0 0.0
        %1776 = vmatpush1.msra.mxu0 0.0
        %1777 = vmatprep.subr.mxu0 0.0
        %1778 = vmatpush1.msra.mxu0 0.0
        %1779 = vmatprep.subr.mxu0 0.0
        %1780 = vmatpush1.msra.mxu0 0.0
        %1781 = vmatprep.subr.mxu0 0.0
        %1782 = vmatpush1.msra.mxu0 0.0
        %1783 = vmatprep.subr.mxu0 0.0
        %1784 = vmatpush1.msra.mxu0 0.0
        %1785 = vmatprep.subr.mxu0 0.0
        %1786 = vmatpush1.msra.mxu0 0.0
        %1787 = vmatprep.subr.mxu0 0.0
        %1788 = vmatpush1.msra.mxu0 0.0
        %1789 = vmatprep.subr.mxu0 0.0
        %1790 = vmatpush1.msra.mxu0 0.0
        %1791 = vmatprep.subr.mxu0 0.0
        %1792 = vmatpush1.msra.mxu0 0.0
        %1793 = vmatprep.subr.mxu0 0.0
        %1794 = vmatpush1.msra.mxu0 0.0
        %1795 = vmatprep.subr.mxu0 0.0
        %1796 = vmatpush1.msra.mxu0 0.0
        %1797 = vmatprep.subr.mxu0 0.0
        %1798 = vmatpush1.msra.mxu0 0.0
        %1799 = vmatprep.subr.mxu0 0.0
        %1800 = vmatpush1.msra.mxu0 0.0
        %1801 = vmatprep.subr.mxu0 0.0
        %1802 = vmatpush1.msra.mxu0 0.0
        %1803 = vmatprep.subr.mxu0 0.0
        %1804 = vmatpush1.msra.mxu0 0.0
        %1805 = vmatprep.subr.mxu0 0.0
        %1806 = vmatpush1.msra.mxu0 0.0
        %1807 = vmatprep.subr.mxu0 0.0
        %1808 = vmatpush1.msra.mxu0 0.0
        %1809 = vmatprep.subr.mxu0 0.0
        %1810 = vmatpush1.msra.mxu0 0.0
        %1811 = vmatprep.subr.mxu0 0.0
        %1812 = vmatpush1.msra.mxu0 0.0
        %1813 = vmatprep.subr.mxu0 0.0
        %1814 = vmatpush1.msra.mxu0 0.0
        %1815 = vmatprep.subr.mxu0 0.0
        %1816 = vmatpush1.msra.mxu0 0.0
        %1817 = vmatprep.subr.mxu0 0.0
        %1818 = vmatpush1.msra.mxu0 0.0
        %1819 = vmatprep.subr.mxu0 0.0
        %1820 = vmatpush1.msra.mxu0 0.0
        %1821 = vmatprep.mubr.f32.mxu0 0.0
        %v1822 = vand.u32 %v364, 4294901760
        %v1823 = vsub.f32 %v364, %v1822
        %v1824 = vand.u32 %v1823, 4294901760
        %1825 = vmatmul.mubr.f32.gmra.mrb[0].mxu0 %v1824
        %v1826 = vpop.f32.mrb[0].mxu0
        %v1827 = vadd.f32 %v1743, %v1826
        %v1828 = vpop.f32.mrb[0].mxu0
        %1829 = vmatprep.mubr.f32.mxu0 0.0
        %v1830 = vand.u32 %v367, 4294901760
        %v1831 = vsub.f32 %v367, %v1830
        %v1832 = vand.u32 %v1831, 4294901760
        %1833 = vmatmul.mubr.f32.gmra.mrb[0].mxu0 %v1832
        %v1834 = vpop.f32.mrb[0].mxu0
        %v1835 = vadd.f32 %v1750, %v1834
        %v1836 = vpop.f32.mrb[0].mxu0
        %1837 = vdwg.mxu0
        %1838 = vmatprep.subr.mxu0 0.0
        %v1839 = vand.u32 %v1476, 4294901760
        %v1840 = vsub.f32 %v1476, %v1839
        %v1841 = vand.u32 %v1840, 4294901760
        %1842 = vmatpush1.msra.mxu0 %v1841
        %1843 = vmatprep.subr.mxu0 0.0
        %v1844 = vand.u32 %v1477, 4294901760
        %v1845 = vsub.f32 %v1477, %v1844
        %v1846 = vand.u32 %v1845, 4294901760
        %1847 = vmatpush1.msra.mxu0 %v1846
        %1848 = vmatprep.subr.mxu0 0.0
        %v1849 = vand.u32 %v1478, 4294901760
        %v1850 = vsub.f32 %v1478, %v1849
        %v1851 = vand.u32 %v1850, 4294901760
        %1852 = vmatpush1.msra.mxu0 %v1851
        %1853 = vmatprep.subr.mxu0 0.0
        %v1854 = vand.u32 %v1479, 4294901760
        %v1855 = vsub.f32 %v1479, %v1854
        %v1856 = vand.u32 %v1855, 4294901760
        %1857 = vmatpush1.msra.mxu0 %v1856
        %1858 = vmatprep.subr.mxu0 0.0
        %1859 = vmatpush1.msra.mxu0 0.0
        %1860 = vmatprep.subr.mxu0 0.0
        %1861 = vmatpush1.msra.mxu0 0.0
        %1862 = vmatprep.subr.mxu0 0.0
        %1863 = vmatpush1.msra.mxu0 0.0
        %1864 = vmatprep.subr.mxu0 0.0
        %1865 = vmatpush1.msra.mxu0 0.0
        %1866 = vmatprep.subr.mxu0 0.0
        %1867 = vmatpush1.msra.mxu0 0.0
        %1868 = vmatprep.subr.mxu0 0.0
        %1869 = vmatpush1.msra.mxu0 0.0
        %1870 = vmatprep.subr.mxu0 0.0
        %1871 = vmatpush1.msra.mxu0 0.0
        %1872 = vmatprep.subr.mxu0 0.0
        %1873 = vmatpush1.msra.mxu0 0.0
        %1874 = vmatprep.subr.mxu0 0.0
        %1875 = vmatpush1.msra.mxu0 0.0
        %1876 = vmatprep.subr.mxu0 0.0
        %1877 = vmatpush1.msra.mxu0 0.0
        %1878 = vmatprep.subr.mxu0 0.0
        %1879 = vmatpush1.msra.mxu0 0.0
        %1880 = vmatprep.subr.mxu0 0.0
        %1881 = vmatpush1.msra.mxu0 0.0
        %1882 = vmatprep.subr.mxu0 0.0
        %1883 = vmatpush1.msra.mxu0 0.0
        %1884 = vmatprep.subr.mxu0 0.0
        %1885 = vmatpush1.msra.mxu0 0.0
        %1886 = vmatprep.subr.mxu0 0.0
        %1887 = vmatpush1.msra.mxu0 0.0
        %1888 = vmatprep.subr.mxu0 0.0
        %1889 = vmatpush1.msra.mxu0 0.0
        %1890 = vmatprep.subr.mxu0 0.0
        %1891 = vmatpush1.msra.mxu0 0.0
        %1892 = vmatprep.subr.mxu0 0.0
        %1893 = vmatpush1.msra.mxu0 0.0
        %1894 = vmatprep.subr.mxu0 0.0
        %1895 = vmatpush1.msra.mxu0 0.0
        %1896 = vmatprep.subr.mxu0 0.0
        %1897 = vmatpush1.msra.mxu0 0.0
        %1898 = vmatprep.subr.mxu0 0.0
        %1899 = vmatpush1.msra.mxu0 0.0
        %1900 = vmatprep.subr.mxu0 0.0
        %1901 = vmatpush1.msra.mxu0 0.0
        %1902 = vmatprep.subr.mxu0 0.0
        %1903 = vmatpush1.msra.mxu0 0.0
        %1904 = vmatprep.subr.mxu0 0.0
        %1905 = vmatpush1.msra.mxu0 0.0
        %1906 = vmatprep.subr.mxu0 0.0
        %1907 = vmatpush1.msra.mxu0 0.0
        %1908 = vmatprep.subr.mxu0 0.0
        %1909 = vmatpush1.msra.mxu0 0.0
        %1910 = vmatprep.subr.mxu0 0.0
        %1911 = vmatpush1.msra.mxu0 0.0
        %1912 = vmatprep.subr.mxu0 0.0
        %1913 = vmatpush1.msra.mxu0 0.0
        %1914 = vmatprep.mubr.f32.mxu0 0.0
        %v1915 = vand.u32 %v364, 4294901760
        %1916 = vmatmul.mubr.f32.gmra.mrb[0].mxu0 %v1915
        %v1917 = vpop.f32.mrb[0].mxu0
        %v1918 = vadd.f32 %v1827, %v1917
        %v1919 = vpop.f32.mrb[0].mxu0
        %1920 = vmatprep.mubr.f32.mxu0 0.0
        %v1921 = vand.u32 %v367, 4294901760
        %1922 = vmatmul.mubr.f32.gmra.mrb[0].mxu0 %v1921
        %v1923 = vpop.f32.mrb[0].mxu0
        %v1924 = vadd.f32 %v1835, %v1923
        %v1925 = vpop.f32.mrb[0].mxu0
        %1926 = vdwg.mxu0
        %1927 = vmatprep.subr.mxu0 0.0
        %v1928 = vand.u32 %v1476, 4294901760
        %1929 = vmatpush1.msra.mxu0 %v1928
        %1930 = vmatprep.subr.mxu0 0.0
        %v1931 = vand.u32 %v1477, 4294901760
        %1932 = vmatpush1.msra.mxu0 %v1931
        %1933 = vmatprep.subr.mxu0 0.0
        %v1934 = vand.u32 %v1478, 4294901760
        %1935 = vmatpush1.msra.mxu0 %v1934
        %1936 = vmatprep.subr.mxu0 0.0
        %v1937 = vand.u32 %v1479, 4294901760
        %1938 = vmatpush1.msra.mxu0 %v1937
        %1939 = vmatprep.subr.mxu0 0.0
        %1940 = vmatpush1.msra.mxu0 0.0
        %1941 = vmatprep.subr.mxu0 0.0
        %1942 = vmatpush1.msra.mxu0 0.0
        %1943 = vmatprep.subr.mxu0 0.0
        %1944 = vmatpush1.msra.mxu0 0.0
        %1945 = vmatprep.subr.mxu0 0.0
        %1946 = vmatpush1.msra.mxu0 0.0
        %1947 = vmatprep.subr.mxu0 0.0
        %1948 = vmatpush1.msra.mxu0 0.0
        %1949 = vmatprep.subr.mxu0 0.0
        %1950 = vmatpush1.msra.mxu0 0.0
        %1951 = vmatprep.subr.mxu0 0.0
        %1952 = vmatpush1.msra.mxu0 0.0
        %1953 = vmatprep.subr.mxu0 0.0
        %1954 = vmatpush1.msra.mxu0 0.0
        %1955 = vmatprep.subr.mxu0 0.0
        %1956 = vmatpush1.msra.mxu0 0.0
        %1957 = vmatprep.subr.mxu0 0.0
        %1958 = vmatpush1.msra.mxu0 0.0
        %1959 = vmatprep.subr.mxu0 0.0
        %1960 = vmatpush1.msra.mxu0 0.0
        %1961 = vmatprep.subr.mxu0 0.0
        %1962 = vmatpush1.msra.mxu0 0.0
        %1963 = vmatprep.subr.mxu0 0.0
        %1964 = vmatpush1.msra.mxu0 0.0
        %1965 = vmatprep.subr.mxu0 0.0
        %1966 = vmatpush1.msra.mxu0 0.0
        %1967 = vmatprep.subr.mxu0 0.0
        %1968 = vmatpush1.msra.mxu0 0.0
        %1969 = vmatprep.subr.mxu0 0.0
        %1970 = vmatpush1.msra.mxu0 0.0
        %1971 = vmatprep.subr.mxu0 0.0
        %1972 = vmatpush1.msra.mxu0 0.0
        %1973 = vmatprep.subr.mxu0 0.0
        %1974 = vmatpush1.msra.mxu0 0.0
        %1975 = vmatprep.subr.mxu0 0.0
        %1976 = vmatpush1.msra.mxu0 0.0
        %1977 = vmatprep.subr.mxu0 0.0
        %1978 = vmatpush1.msra.mxu0 0.0
        %1979 = vmatprep.subr.mxu0 0.0
        %1980 = vmatpush1.msra.mxu0 0.0
        %1981 = vmatprep.subr.mxu0 0.0
        %1982 = vmatpush1.msra.mxu0 0.0
        %1983 = vmatprep.subr.mxu0 0.0
        %1984 = vmatpush1.msra.mxu0 0.0
        %1985 = vmatprep.subr.mxu0 0.0
        %1986 = vmatpush1.msra.mxu0 0.0
        %1987 = vmatprep.subr.mxu0 0.0
        %1988 = vmatpush1.msra.mxu0 0.0
        %1989 = vmatprep.subr.mxu0 0.0
        %1990 = vmatpush1.msra.mxu0 0.0
        %1991 = vmatprep.subr.mxu0 0.0
        %1992 = vmatpush1.msra.mxu0 0.0
        %1993 = vmatprep.subr.mxu0 0.0
        %1994 = vmatpush1.msra.mxu0 0.0
        %1995 = vmatprep.mubr.f32.mxu0 0.0
        %v1996 = vand.u32 %v364, 4294901760
        %1997 = vmatmul.mubr.f32.gmra.mrb[0].mxu0 %v1996
        %v1998 = vpop.f32.mrb[0].mxu0
        %v1999 = vadd.f32 %v1918, %v1998
        %v2000 = vpop.f32.mrb[0].mxu0
        %2001 = vmatprep.mubr.f32.mxu0 0.0
        %v2002 = vand.u32 %v367, 4294901760
        %2003 = vmatmul.mubr.f32.gmra.mrb[0].mxu0 %v2002
        %v2004 = vpop.f32.mrb[0].mxu0
        %v2005 = vadd.f32 %v1924, %v2004
        %v2006 = vpop.f32.mrb[0].mxu0
        %2007 = vdwg.mxu0
        %v2009 = vsel %vm362, %v1999, 0
        %v2012 = vsel %vm362, %v2005, 0
        %2014 = vmatprep.subr.mxu0 0.0
        %v2015 = vand.u32 %v354, 4294901760
        %2016 = vmatpush1.msra.mxu0 %v2015
        %2017 = vmatprep.subr.mxu0 0.0
        %v2018 = vand.u32 %v355, 4294901760
        %2019 = vmatpush1.msra.mxu0 %v2018
        %2020 = vmatprep.subr.mxu0 0.0
        %v2021 = vand.u32 %v356, 4294901760
        %2022 = vmatpush1.msra.mxu0 %v2021
        %2023 = vmatprep.subr.mxu0 0.0
        %v2024 = vand.u32 %v357, 4294901760
        %2025 = vmatpush1.msra.mxu0 %v2024
        %2026 = vmatprep.subr.mxu0 0.0
        %2027 = vmatpush1.msra.mxu0 0.0
        %2028 = vmatprep.subr.mxu0 0.0
        %2029 = vmatpush1.msra.mxu0 0.0
        %2030 = vmatprep.subr.mxu0 0.0
        %2031 = vmatpush1.msra.mxu0 0.0
        %2032 = vmatprep.subr.mxu0 0.0
        %2033 = vmatpush1.msra.mxu0 0.0
        %2034 = vmatprep.subr.mxu0 0.0
        %2035 = vmatpush1.msra.mxu0 0.0
        %2036 = vmatprep.subr.mxu0 0.0
        %2037 = vmatpush1.msra.mxu0 0.0
        %2038 = vmatprep.subr.mxu0 0.0
        %2039 = vmatpush1.msra.mxu0 0.0
        %2040 = vmatprep.subr.mxu0 0.0
        %2041 = vmatpush1.msra.mxu0 0.0
        %2042 = vmatprep.subr.mxu0 0.0
        %2043 = vmatpush1.msra.mxu0 0.0
        %2044 = vmatprep.subr.mxu0 0.0
        %2045 = vmatpush1.msra.mxu0 0.0
        %2046 = vmatprep.subr.mxu0 0.0
        %2047 = vmatpush1.msra.mxu0 0.0
        %2048 = vmatprep.subr.mxu0 0.0
        %2049 = vmatpush1.msra.mxu0 0.0
        %2050 = vmatprep.subr.mxu0 0.0
        %2051 = vmatpush1.msra.mxu0 0.0
        %2052 = vmatprep.subr.mxu0 0.0
        %2053 = vmatpush1.msra.mxu0 0.0
        %2054 = vmatprep.subr.mxu0 0.0
        %2055 = vmatpush1.msra.mxu0 0.0
        %2056 = vmatprep.subr.mxu0 0.0
        %2057 = vmatpush1.msra.mxu0 0.0
        %2058 = vmatprep.subr.mxu0 0.0
        %2059 = vmatpush1.msra.mxu0 0.0
        %2060 = vmatprep.subr.mxu0 0.0
        %2061 = vmatpush1.msra.mxu0 0.0
        %2062 = vmatprep.subr.mxu0 0.0
        %2063 = vmatpush1.msra.mxu0 0.0
        %2064 = vmatprep.subr.mxu0 0.0
        %2065 = vmatpush1.msra.mxu0 0.0
        %2066 = vmatprep.subr.mxu0 0.0
        %2067 = vmatpush1.msra.mxu0 0.0
        %2068 = vmatprep.subr.mxu0 0.0
        %2069 = vmatpush1.msra.mxu0 0.0
        %2070 = vmatprep.subr.mxu0 0.0
        %2071 = vmatpush1.msra.mxu0 0.0
        %2072 = vmatprep.subr.mxu0 0.0
        %2073 = vmatpush1.msra.mxu0 0.0
        %2074 = vmatprep.subr.mxu0 0.0
        %2075 = vmatpush1.msra.mxu0 0.0
        %2076 = vmatprep.subr.mxu0 0.0
        %2077 = vmatpush1.msra.mxu0 0.0
        %2078 = vmatprep.subr.mxu0 0.0
        %2079 = vmatpush1.msra.mxu0 0.0
        %2080 = vmatprep.subr.mxu0 0.0
        %2081 = vmatpush1.msra.mxu0 0.0
        %2082 = vmatprep.mubr.f32.mxu0 0.0
        %v2083 = vand.u32 %v2009, 4294901760
        %v2084 = vsub.f32 %v2009, %v2083
        %v2085 = vand.u32 %v2084, 4294901760
        %v2086 = vsub.f32 %v2084, %v2085
        %v2087 = vand.u32 %v2086, 4294901760
        %2088 = vmatmul.mubr.f32.gmra.mrb[0].mxu0 %v2087
        %v2089 = vpop.f32.mrb[0].mxu0
        %v2090 = vadd.f32 0.0, %v2089
        %v2091 = vpop.f32.mrb[0].mxu0
        %2092 = vmatprep.mubr.f32.mxu0 0.0
        %v2093 = vand.u32 %v2012, 4294901760
        %v2094 = vsub.f32 %v2012, %v2093
        %v2095 = vand.u32 %v2094, 4294901760
        %v2096 = vsub.f32 %v2094, %v2095
        %v2097 = vand.u32 %v2096, 4294901760
        %2098 = vmatmul.mubr.f32.gmra.mrb[0].mxu0 %v2097
        %v2099 = vpop.f32.mrb[0].mxu0
        %v2100 = vadd.f32 0.0, %v2099
        %v2101 = vpop.f32.mrb[0].mxu0
        %2102 = vdwg.mxu0
        %2103 = vmatprep.subr.mxu0 0.0
        %v2104 = vand.u32 %v354, 4294901760
        %v2105 = vsub.f32 %v354, %v2104
        %v2106 = vand.u32 %v2105, 4294901760
        %v2107 = vsub.f32 %v2105, %v2106
        %v2108 = vand.u32 %v2107, 4294901760
        %2109 = vmatpush1.msra.mxu0 %v2108
        %2110 = vmatprep.subr.mxu0 0.0
        %v2111 = vand.u32 %v355, 4294901760
        %v2112 = vsub.f32 %v355, %v2111
        %v2113 = vand.u32 %v2112, 4294901760
        %v2114 = vsub.f32 %v2112, %v2113
        %v2115 = vand.u32 %v2114, 4294901760
        %2116 = vmatpush1.msra.mxu0 %v2115
        %2117 = vmatprep.subr.mxu0 0.0
        %v2118 = vand.u32 %v356, 4294901760
        %v2119 = vsub.f32 %v356, %v2118
        %v2120 = vand.u32 %v2119, 4294901760
        %v2121 = vsub.f32 %v2119, %v2120
        %v2122 = vand.u32 %v2121, 4294901760
        %2123 = vmatpush1.msra.mxu0 %v2122
        %2124 = vmatprep.subr.mxu0 0.0
        %v2125 = vand.u32 %v357, 4294901760
        %v2126 = vsub.f32 %v357, %v2125
        %v2127 = vand.u32 %v2126, 4294901760
        %v2128 = vsub.f32 %v2126, %v2127
        %v2129 = vand.u32 %v2128, 4294901760
        %2130 = vmatpush1.msra.mxu0 %v2129
        %2131 = vmatprep.subr.mxu0 0.0
        %2132 = vmatpush1.msra.mxu0 0.0
        %2133 = vmatprep.subr.mxu0 0.0
        %2134 = vmatpush1.msra.mxu0 0.0
        %2135 = vmatprep.subr.mxu0 0.0
        %2136 = vmatpush1.msra.mxu0 0.0
        %2137 = vmatprep.subr.mxu0 0.0
        %2138 = vmatpush1.msra.mxu0 0.0
        %2139 = vmatprep.subr.mxu0 0.0
        %2140 = vmatpush1.msra.mxu0 0.0
        %2141 = vmatprep.subr.mxu0 0.0
        %2142 = vmatpush1.msra.mxu0 0.0
        %2143 = vmatprep.subr.mxu0 0.0
        %2144 = vmatpush1.msra.mxu0 0.0
        %2145 = vmatprep.subr.mxu0 0.0
        %2146 = vmatpush1.msra.mxu0 0.0
        %2147 = vmatprep.subr.mxu0 0.0
        %2148 = vmatpush1.msra.mxu0 0.0
        %2149 = vmatprep.subr.mxu0 0.0
        %2150 = vmatpush1.msra.mxu0 0.0
        %2151 = vmatprep.subr.mxu0 0.0
        %2152 = vmatpush1.msra.mxu0 0.0
        %2153 = vmatprep.subr.mxu0 0.0
        %2154 = vmatpush1.msra.mxu0 0.0
        %2155 = vmatprep.subr.mxu0 0.0
        %2156 = vmatpush1.msra.mxu0 0.0
        %2157 = vmatprep.subr.mxu0 0.0
        %2158 = vmatpush1.msra.mxu0 0.0
        %2159 = vmatprep.subr.mxu0 0.0
        %2160 = vmatpush1.msra.mxu0 0.0
        %2161 = vmatprep.subr.mxu0 0.0
        %2162 = vmatpush1.msra.mxu0 0.0
        %2163 = vmatprep.subr.mxu0 0.0
        %2164 = vmatpush1.msra.mxu0 0.0
        %2165 = vmatprep.subr.mxu0 0.0
        %2166 = vmatpush1.msra.mxu0 0.0
        %2167 = vmatprep.subr.mxu0 0.0
        %2168 = vmatpush1.msra.mxu0 0.0
        %2169 = vmatprep.subr.mxu0 0.0
        %2170 = vmatpush1.msra.mxu0 0.0
        %2171 = vmatprep.subr.mxu0 0.0
        %2172 = vmatpush1.msra.mxu0 0.0
        %2173 = vmatprep.subr.mxu0 0.0
        %2174 = vmatpush1.msra.mxu0 0.0
        %2175 = vmatprep.subr.mxu0 0.0
        %2176 = vmatpush1.msra.mxu0 0.0
        %2177 = vmatprep.subr.mxu0 0.0
        %2178 = vmatpush1.msra.mxu0 0.0
        %2179 = vmatprep.subr.mxu0 0.0
        %2180 = vmatpush1.msra.mxu0 0.0
        %2181 = vmatprep.subr.mxu0 0.0
        %2182 = vmatpush1.msra.mxu0 0.0
        %2183 = vmatprep.subr.mxu0 0.0
        %2184 = vmatpush1.msra.mxu0 0.0
        %2185 = vmatprep.subr.mxu0 0.0
        %2186 = vmatpush1.msra.mxu0 0.0
        %2187 = vmatprep.mubr.f32.mxu0 0.0
        %v2188 = vand.u32 %v2009, 4294901760
        %2189 = vmatmul.mubr.f32.gmra.mrb[0].mxu0 %v2188
        %v2190 = vpop.f32.mrb[0].mxu0
        %v2191 = vadd.f32 %v2090, %v2190
        %v2192 = vpop.f32.mrb[0].mxu0
        %2193 = vmatprep.mubr.f32.mxu0 0.0
        %v2194 = vand.u32 %v2012, 4294901760
        %2195 = vmatmul.mubr.f32.gmra.mrb[0].mxu0 %v2194
        %v2196 = vpop.f32.mrb[0].mxu0
        %v2197 = vadd.f32 %v2100, %v2196
        %v2198 = vpop.f32.mrb[0].mxu0
        %2199 = vdwg.mxu0
        %2200 = vmatprep.subr.mxu0 0.0
        %v2201 = vand.u32 %v354, 4294901760
        %v2202 = vsub.f32 %v354, %v2201
        %2203 = vmatpush1.msra.mxu0 %v2202
        %2204 = vmatprep.subr.mxu0 0.0
        %v2205 = vand.u32 %v355, 4294901760
        %v2206 = vsub.f32 %v355, %v2205
        %2207 = vmatpush1.msra.mxu0 %v2206
        %2208 = vmatprep.subr.mxu0 0.0
        %v2209 = vand.u32 %v356, 4294901760
        %v2210 = vsub.f32 %v356, %v2209
        %2211 = vmatpush1.msra.mxu0 %v2210
        %2212 = vmatprep.subr.mxu0 0.0
        %v2213 = vand.u32 %v357, 4294901760
        %v2214 = vsub.f32 %v357, %v2213
        %2215 = vmatpush1.msra.mxu0 %v2214
        %2216 = vmatprep.subr.mxu0 0.0
        %2217 = vmatpush1.msra.mxu0 0.0
        %2218 = vmatprep.subr.mxu0 0.0
        %2219 = vmatpush1.msra.mxu0 0.0
        %2220 = vmatprep.subr.mxu0 0.0
        %2221 = vmatpush1.msra.mxu0 0.0
        %2222 = vmatprep.subr.mxu0 0.0
        %2223 = vmatpush1.msra.mxu0 0.0
        %2224 = vmatprep.subr.mxu0 0.0
        %2225 = vmatpush1.msra.mxu0 0.0
        %2226 = vmatprep.subr.mxu0 0.0
        %2227 = vmatpush1.msra.mxu0 0.0
        %2228 = vmatprep.subr.mxu0 0.0
        %2229 = vmatpush1.msra.mxu0 0.0
        %2230 = vmatprep.subr.mxu0 0.0
        %2231 = vmatpush1.msra.mxu0 0.0
        %2232 = vmatprep.subr.mxu0 0.0
        %2233 = vmatpush1.msra.mxu0 0.0
        %2234 = vmatprep.subr.mxu0 0.0
        %2235 = vmatpush1.msra.mxu0 0.0
        %2236 = vmatprep.subr.mxu0 0.0
        %2237 = vmatpush1.msra.mxu0 0.0
        %2238 = vmatprep.subr.mxu0 0.0
        %2239 = vmatpush1.msra.mxu0 0.0
        %2240 = vmatprep.subr.mxu0 0.0
        %2241 = vmatpush1.msra.mxu0 0.0
        %2242 = vmatprep.subr.mxu0 0.0
        %2243 = vmatpush1.msra.mxu0 0.0
        %2244 = vmatprep.subr.mxu0 0.0
        %2245 = vmatpush1.msra.mxu0 0.0
        %2246 = vmatprep.subr.mxu0 0.0
        %2247 = vmatpush1.msra.mxu0 0.0
        %2248 = vmatprep.subr.mxu0 0.0
        %2249 = vmatpush1.msra.mxu0 0.0
        %2250 = vmatprep.subr.mxu0 0.0
        %2251 = vmatpush1.msra.mxu0 0.0
        %2252 = vmatprep.subr.mxu0 0.0
        %2253 = vmatpush1.msra.mxu0 0.0
        %2254 = vmatprep.subr.mxu0 0.0
        %2255 = vmatpush1.msra.mxu0 0.0
        %2256 = vmatprep.subr.mxu0 0.0
        %2257 = vmatpush1.msra.mxu0 0.0
        %2258 = vmatprep.subr.mxu0 0.0
        %2259 = vmatpush1.msra.mxu0 0.0
        %2260 = vmatprep.subr.mxu0 0.0
        %2261 = vmatpush1.msra.mxu0 0.0
        %2262 = vmatprep.subr.mxu0 0.0
        %2263 = vmatpush1.msra.mxu0 0.0
        %2264 = vmatprep.subr.mxu0 0.0
        %2265 = vmatpush1.msra.mxu0 0.0
        %2266 = vmatprep.subr.mxu0 0.0
        %2267 = vmatpush1.msra.mxu0 0.0
        %2268 = vmatprep.subr.mxu0 0.0
        %2269 = vmatpush1.msra.mxu0 0.0
        %2270 = vmatprep.subr.mxu0 0.0
        %2271 = vmatpush1.msra.mxu0 0.0
        %2272 = vmatprep.mubr.f32.mxu0 0.0
        %v2273 = vand.u32 %v2009, 4294901760
        %v2274 = vsub.f32 %v2009, %v2273
        %2275 = vmatmul.mubr.f32.gmra.mrb[0].mxu0 %v2274
        %v2276 = vpop.f32.mrb[0].mxu0
        %v2277 = vadd.f32 %v2191, %v2276
        %v2278 = vpop.f32.mrb[0].mxu0
        %2279 = vmatprep.mubr.f32.mxu0 0.0
        %v2280 = vand.u32 %v2012, 4294901760
        %v2281 = vsub.f32 %v2012, %v2280
        %2282 = vmatmul.mubr.f32.gmra.mrb[0].mxu0 %v2281
        %v2283 = vpop.f32.mrb[0].mxu0
        %v2284 = vadd.f32 %v2197, %v2283
        %v2285 = vpop.f32.mrb[0].mxu0
        %2286 = vdwg.mxu0
        %2287 = vmatprep.subr.mxu0 0.0
        %v2288 = vand.u32 %v354, 4294901760
        %2289 = vmatpush1.msra.mxu0 %v2288
        %2290 = vmatprep.subr.mxu0 0.0
        %v2291 = vand.u32 %v355, 4294901760
        %2292 = vmatpush1.msra.mxu0 %v2291
        %2293 = vmatprep.subr.mxu0 0.0
        %v2294 = vand.u32 %v356, 4294901760
        %2295 = vmatpush1.msra.mxu0 %v2294
        %2296 = vmatprep.subr.mxu0 0.0
        %v2297 = vand.u32 %v357, 4294901760
        %2298 = vmatpush1.msra.mxu0 %v2297
        %2299 = vmatprep.subr.mxu0 0.0
        %2300 = vmatpush1.msra.mxu0 0.0
        %2301 = vmatprep.subr.mxu0 0.0
        %2302 = vmatpush1.msra.mxu0 0.0
        %2303 = vmatprep.subr.mxu0 0.0
        %2304 = vmatpush1.msra.mxu0 0.0
        %2305 = vmatprep.subr.mxu0 0.0
        %2306 = vmatpush1.msra.mxu0 0.0
        %2307 = vmatprep.subr.mxu0 0.0
        %2308 = vmatpush1.msra.mxu0 0.0
        %2309 = vmatprep.subr.mxu0 0.0
        %2310 = vmatpush1.msra.mxu0 0.0
        %2311 = vmatprep.subr.mxu0 0.0
        %2312 = vmatpush1.msra.mxu0 0.0
        %2313 = vmatprep.subr.mxu0 0.0
        %2314 = vmatpush1.msra.mxu0 0.0
        %2315 = vmatprep.subr.mxu0 0.0
        %2316 = vmatpush1.msra.mxu0 0.0
        %2317 = vmatprep.subr.mxu0 0.0
        %2318 = vmatpush1.msra.mxu0 0.0
        %2319 = vmatprep.subr.mxu0 0.0
        %2320 = vmatpush1.msra.mxu0 0.0
        %2321 = vmatprep.subr.mxu0 0.0
        %2322 = vmatpush1.msra.mxu0 0.0
        %2323 = vmatprep.subr.mxu0 0.0
        %2324 = vmatpush1.msra.mxu0 0.0
        %2325 = vmatprep.subr.mxu0 0.0
        %2326 = vmatpush1.msra.mxu0 0.0
        %2327 = vmatprep.subr.mxu0 0.0
        %2328 = vmatpush1.msra.mxu0 0.0
        %2329 = vmatprep.subr.mxu0 0.0
        %2330 = vmatpush1.msra.mxu0 0.0
        %2331 = vmatprep.subr.mxu0 0.0
        %2332 = vmatpush1.msra.mxu0 0.0
        %2333 = vmatprep.subr.mxu0 0.0
        %2334 = vmatpush1.msra.mxu0 0.0
        %2335 = vmatprep.subr.mxu0 0.0
        %2336 = vmatpush1.msra.mxu0 0.0
        %2337 = vmatprep.subr.mxu0 0.0
        %2338 = vmatpush1.msra.mxu0 0.0
        %2339 = vmatprep.subr.mxu0 0.0
        %2340 = vmatpush1.msra.mxu0 0.0
        %2341 = vmatprep.subr.mxu0 0.0
        %2342 = vmatpush1.msra.mxu0 0.0
        %2343 = vmatprep.subr.mxu0 0.0
        %2344 = vmatpush1.msra.mxu0 0.0
        %2345 = vmatprep.subr.mxu0 0.0
        %2346 = vmatpush1.msra.mxu0 0.0
        %2347 = vmatprep.subr.mxu0 0.0
        %2348 = vmatpush1.msra.mxu0 0.0
        %2349 = vmatprep.subr.mxu0 0.0
        %2350 = vmatpush1.msra.mxu0 0.0
        %2351 = vmatprep.subr.mxu0 0.0
        %2352 = vmatpush1.msra.mxu0 0.0
        %2353 = vmatprep.subr.mxu0 0.0
        %2354 = vmatpush1.msra.mxu0 0.0
        %2355 = vmatprep.mubr.f32.mxu0 0.0
        %v2356 = vand.u32 %v2009, 4294901760
        %v2357 = vsub.f32 %v2009, %v2356
        %v2358 = vand.u32 %v2357, 4294901760
        %2359 = vmatmul.mubr.f32.gmra.mrb[0].mxu0 %v2358
        %v2360 = vpop.f32.mrb[0].mxu0
        %v2361 = vadd.f32 %v2277, %v2360
        %v2362 = vpop.f32.mrb[0].mxu0
        %2363 = vmatprep.mubr.f32.mxu0 0.0
        %v2364 = vand.u32 %v2012, 4294901760
        %v2365 = vsub.f32 %v2012, %v2364
        %v2366 = vand.u32 %v2365, 4294901760
        %2367 = vmatmul.mubr.f32.gmra.mrb[0].mxu0 %v2366
        %v2368 = vpop.f32.mrb[0].mxu0
        %v2369 = vadd.f32 %v2284, %v2368
        %v2370 = vpop.f32.mrb[0].mxu0
        %2371 = vdwg.mxu0
        %2372 = vmatprep.subr.mxu0 0.0
        %v2373 = vand.u32 %v354, 4294901760
        %v2374 = vsub.f32 %v354, %v2373
        %v2375 = vand.u32 %v2374, 4294901760
        %2376 = vmatpush1.msra.mxu0 %v2375
        %2377 = vmatprep.subr.mxu0 0.0
        %v2378 = vand.u32 %v355, 4294901760
        %v2379 = vsub.f32 %v355, %v2378
        %v2380 = vand.u32 %v2379, 4294901760
        %2381 = vmatpush1.msra.mxu0 %v2380
        %2382 = vmatprep.subr.mxu0 0.0
        %v2383 = vand.u32 %v356, 4294901760
        %v2384 = vsub.f32 %v356, %v2383
        %v2385 = vand.u32 %v2384, 4294901760
        %2386 = vmatpush1.msra.mxu0 %v2385
        %2387 = vmatprep.subr.mxu0 0.0
        %v2388 = vand.u32 %v357, 4294901760
        %v2389 = vsub.f32 %v357, %v2388
        %v2390 = vand.u32 %v2389, 4294901760
        %2391 = vmatpush1.msra.mxu0 %v2390
        %2392 = vmatprep.subr.mxu0 0.0
        %2393 = vmatpush1.msra.mxu0 0.0
        %2394 = vmatprep.subr.mxu0 0.0
        %2395 = vmatpush1.msra.mxu0 0.0
        %2396 = vmatprep.subr.mxu0 0.0
        %2397 = vmatpush1.msra.mxu0 0.0
        %2398 = vmatprep.subr.mxu0 0.0
        %2399 = vmatpush1.msra.mxu0 0.0
        %2400 = vmatprep.subr.mxu0 0.0
        %2401 = vmatpush1.msra.mxu0 0.0
        %2402 = vmatprep.subr.mxu0 0.0
        %2403 = vmatpush1.msra.mxu0 0.0
        %2404 = vmatprep.subr.mxu0 0.0
        %2405 = vmatpush1.msra.mxu0 0.0
        %2406 = vmatprep.subr.mxu0 0.0
        %2407 = vmatpush1.msra.mxu0 0.0
        %2408 = vmatprep.subr.mxu0 0.0
        %2409 = vmatpush1.msra.mxu0 0.0
        %2410 = vmatprep.subr.mxu0 0.0
        %2411 = vmatpush1.msra.mxu0 0.0
        %2412 = vmatprep.subr.mxu0 0.0
        %2413 = vmatpush1.msra.mxu0 0.0
        %2414 = vmatprep.subr.mxu0 0.0
        %2415 = vmatpush1.msra.mxu0 0.0
        %2416 = vmatprep.subr.mxu0 0.0
        %2417 = vmatpush1.msra.mxu0 0.0
        %2418 = vmatprep.subr.mxu0 0.0
        %2419 = vmatpush1.msra.mxu0 0.0
        %2420 = vmatprep.subr.mxu0 0.0
        %2421 = vmatpush1.msra.mxu0 0.0
        %2422 = vmatprep.subr.mxu0 0.0
        %2423 = vmatpush1.msra.mxu0 0.0
        %2424 = vmatprep.subr.mxu0 0.0
        %2425 = vmatpush1.msra.mxu0 0.0
        %2426 = vmatprep.subr.mxu0 0.0
        %2427 = vmatpush1.msra.mxu0 0.0
        %2428 = vmatprep.subr.mxu0 0.0
        %2429 = vmatpush1.msra.mxu0 0.0
        %2430 = vmatprep.subr.mxu0 0.0
        %2431 = vmatpush1.msra.mxu0 0.0
        %2432 = vmatprep.subr.mxu0 0.0
        %2433 = vmatpush1.msra.mxu0 0.0
        %2434 = vmatprep.subr.mxu0 0.0
        %2435 = vmatpush1.msra.mxu0 0.0
        %2436 = vmatprep.subr.mxu0 0.0
        %2437 = vmatpush1.msra.mxu0 0.0
        %2438 = vmatprep.subr.mxu0 0.0
        %2439 = vmatpush1.msra.mxu0 0.0
        %2440 = vmatprep.subr.mxu0 0.0
        %2441 = vmatpush1.msra.mxu0 0.0
        %2442 = vmatprep.subr.mxu0 0.0
        %2443 = vmatpush1.msra.mxu0 0.0
        %2444 = vmatprep.subr.mxu0 0.0
        %2445 = vmatpush1.msra.mxu0 0.0
        %2446 = vmatprep.subr.mxu0 0.0
        %2447 = vmatpush1.msra.mxu0 0.0
        %2448 = vmatprep.mubr.f32.mxu0 0.0
        %v2449 = vand.u32 %v2009, 4294901760
        %2450 = vmatmul.mubr.f32.gmra.mrb[0].mxu0 %v2449
        %v2451 = vpop.f32.mrb[0].mxu0
        %v2452 = vadd.f32 %v2361, %v2451
        %v2453 = vpop.f32.mrb[0].mxu0
        %2454 = vmatprep.mubr.f32.mxu0 0.0
        %v2455 = vand.u32 %v2012, 4294901760
        %2456 = vmatmul.mubr.f32.gmra.mrb[0].mxu0 %v2455
        %v2457 = vpop.f32.mrb[0].mxu0
        %v2458 = vadd.f32 %v2369, %v2457
        %v2459 = vpop.f32.mrb[0].mxu0
        %2460 = vdwg.mxu0
        %2461 = vmatprep.subr.mxu0 0.0
        %v2462 = vand.u32 %v354, 4294901760
        %2463 = vmatpush1.msra.mxu0 %v2462
        %2464 = vmatprep.subr.mxu0 0.0
        %v2465 = vand.u32 %v355, 4294901760
        %2466 = vmatpush1.msra.mxu0 %v2465
        %2467 = vmatprep.subr.mxu0 0.0
        %v2468 = vand.u32 %v356, 4294901760
        %2469 = vmatpush1.msra.mxu0 %v2468
        %2470 = vmatprep.subr.mxu0 0.0
        %v2471 = vand.u32 %v357, 4294901760
        %2472 = vmatpush1.msra.mxu0 %v2471
        %2473 = vmatprep.subr.mxu0 0.0
        %2474 = vmatpush1.msra.mxu0 0.0
        %2475 = vmatprep.subr.mxu0 0.0
        %2476 = vmatpush1.msra.mxu0 0.0
        %2477 = vmatprep.subr.mxu0 0.0
        %2478 = vmatpush1.msra.mxu0 0.0
        %2479 = vmatprep.subr.mxu0 0.0
        %2480 = vmatpush1.msra.mxu0 0.0
        %2481 = vmatprep.subr.mxu0 0.0
        %2482 = vmatpush1.msra.mxu0 0.0
        %2483 = vmatprep.subr.mxu0 0.0
        %2484 = vmatpush1.msra.mxu0 0.0
        %2485 = vmatprep.subr.mxu0 0.0
        %2486 = vmatpush1.msra.mxu0 0.0
        %2487 = vmatprep.subr.mxu0 0.0
        %2488 = vmatpush1.msra.mxu0 0.0
        %2489 = vmatprep.subr.mxu0 0.0
        %2490 = vmatpush1.msra.mxu0 0.0
        %2491 = vmatprep.subr.mxu0 0.0
        %2492 = vmatpush1.msra.mxu0 0.0
        %2493 = vmatprep.subr.mxu0 0.0
        %2494 = vmatpush1.msra.mxu0 0.0
        %2495 = vmatprep.subr.mxu0 0.0
        %2496 = vmatpush1.msra.mxu0 0.0
        %2497 = vmatprep.subr.mxu0 0.0
        %2498 = vmatpush1.msra.mxu0 0.0
        %2499 = vmatprep.subr.mxu0 0.0
        %2500 = vmatpush1.msra.mxu0 0.0
        %2501 = vmatprep.subr.mxu0 0.0
        %2502 = vmatpush1.msra.mxu0 0.0
        %2503 = vmatprep.subr.mxu0 0.0
        %2504 = vmatpush1.msra.mxu0 0.0
        %2505 = vmatprep.subr.mxu0 0.0
        %2506 = vmatpush1.msra.mxu0 0.0
        %2507 = vmatprep.subr.mxu0 0.0
        %2508 = vmatpush1.msra.mxu0 0.0
        %2509 = vmatprep.subr.mxu0 0.0
        %2510 = vmatpush1.msra.mxu0 0.0
        %2511 = vmatprep.subr.mxu0 0.0
        %2512 = vmatpush1.msra.mxu0 0.0
        %2513 = vmatprep.subr.mxu0 0.0
        %2514 = vmatpush1.msra.mxu0 0.0
        %2515 = vmatprep.subr.mxu0 0.0
        %2516 = vmatpush1.msra.mxu0 0.0
        %2517 = vmatprep.subr.mxu0 0.0
        %2518 = vmatpush1.msra.mxu0 0.0
        %2519 = vmatprep.subr.mxu0 0.0
        %2520 = vmatpush1.msra.mxu0 0.0
        %2521 = vmatprep.subr.mxu0 0.0
        %2522 = vmatpush1.msra.mxu0 0.0
        %2523 = vmatprep.subr.mxu0 0.0
        %2524 = vmatpush1.msra.mxu0 0.0
        %2525 = vmatprep.subr.mxu0 0.0
        %2526 = vmatpush1.msra.mxu0 0.0
        %2527 = vmatprep.subr.mxu0 0.0
        %2528 = vmatpush1.msra.mxu0 0.0
        %2529 = vmatprep.mubr.f32.mxu0 0.0
        %v2530 = vand.u32 %v2009, 4294901760
        %2531 = vmatmul.mubr.f32.gmra.mrb[0].mxu0 %v2530
        %v2532 = vpop.f32.mrb[0].mxu0
        %v2533 = vadd.f32 %v2452, %v2532
        %v2534 = vpop.f32.mrb[0].mxu0
        %2535 = vmatprep.mubr.f32.mxu0 0.0
        %v2536 = vand.u32 %v2012, 4294901760
        %2537 = vmatmul.mubr.f32.gmra.mrb[0].mxu0 %v2536
        %v2538 = vpop.f32.mrb[0].mxu0
        %v2539 = vadd.f32 %v2458, %v2538
        %v2540 = vpop.f32.mrb[0].mxu0
        %2541 = vdwg.mxu0
        %s2542 = scalar_lea.vmem [#allocation2], 2
        %v2543 = vld [vmem:[%s2542] sm:$0x3]
        %v2544 = vmul.f32 %v348, %v2533
        %v2545 = vmul.f32 %v349, %v2539
        %v2546 = vmul.f32 %v350, %v2533
        %v2547 = vmul.f32 %v351, %v2539
        %v2548 = vsel %vm323, %v2544, 0.0
        %v2549 = vsel %vm323, %v2545, 0.0
        %v2550 = vadd.f32 %v2548, %v2549
        %v2551 = vrot.slane %v2550, 4
        %v2552 = vadd.f32 %v2550, %v2551
        %v2553 = vrot.slane %v2552, 2
        %v2554 = vadd.f32 %v2552, %v2553
        %v2555 = vrot.slane %v2554, 1
        %v2556 = vadd.f32 %v2554, %v2555
        %v2557 = vsel %vm323, %v2546, 0.0
        %v2558 = vsel %vm323, %v2547, 0.0
        %v2559 = vadd.f32 %v2557, %v2558
        %v2560 = vrot.slane %v2559, 4
        %v2561 = vadd.f32 %v2559, %v2560
        %v2562 = vrot.slane %v2561, 2
        %v2563 = vadd.f32 %v2561, %v2562
        %v2564 = vrot.slane %v2563, 1
        %v2565 = vadd.f32 %v2563, %v2564
        %v2568 = vsel %vm1456, %v2565, %v2556
        %v2570 = vadd.f32 %v2543, %v2568
        %2571 = vst.msk [vmem:[%s2542] sm:$0x3] %vm1460, %v2570
        %s2572 = scalar_lea.vmem [#allocation3], 1
        %v2573 = vld [vmem:[%s2572] sm:$0x1]
        %v2574 = vsel %vm323, %v2533, 0.0
        %v2575 = vsel %vm323, %v2539, 0.0
        %v2576 = vadd.f32 %v2574, %v2575
        %v2577 = vrot.slane %v2576, 4
        %v2578 = vadd.f32 %v2576, %v2577
        %v2579 = vrot.slane %v2578, 2
        %v2580 = vadd.f32 %v2578, %v2579
        %v2581 = vrot.slane %v2580, 1
        %v2582 = vadd.f32 %v2580, %v2581
        %v2583 = vadd.f32 %v2573, %v2582
        %2584 = vst.msk [vmem:[%s2572] sm:$0x1] %vm1473, %v2583
        // Predicated region
        $region49: #{tpu_custom_call.1} parent=35 // pred_check
          %p2585 = pneg %p297
        $region50: #{tpu_custom_call.1} parent=35 // pred_check_branch
          %2587 = sbr.rel (%p2585) target = $region52
        $region51: #{tpu_custom_call.1} parent=35 // pred_region
          %v2588 = vld [vmem:[#allocation3] sm:$0x1]
          %v2589 = vld [vmem:[#allocation3 + $0x1] sm:$0x1]
          %v2590 = vsel %vm1473, %v2588, 0.0
          %2591 = vadd.xlane.f32.xlu0 %v2590
          %v2592 = vpop.xlane.xlu0 %2591
          %v2593 = vsel %vm1473, %v2589, 0.0
          %2594 = vadd.xlane.f32.xlu0 %v2593
          %v2595 = vpop.xlane.xlu0 %2594
          %v2596 = vld [vmem:[#allocation2] sm:$0x3]
          %v2597 = vld [vmem:[#allocation2 + $0x2] sm:$0x3]
          %v2598 = vsel %vm1460, %v2596, 0.0
          %2599 = vadd.xlane.f32.xlu0 %v2598
          %v2600 = vpop.xlane.xlu0 %2599
          %v2601 = vsel %vm1460, %v2597, 0.0
          %2602 = vadd.xlane.f32.xlu0 %v2601
          %v2603 = vpop.xlane.xlu0 %2602
          %v2604 = vlaneseq
          %v2605 = vshrl.u32 %v2604, 7
          %v2606 = vsub.s32 0, %v2605
          %v2607 = vrot.slane %v2592, %v2606
          %v2608 = vlaneseq
          %v2609 = vshrl.u32 %v2608, 7
          %v2610 = vsub.s32 0, %v2609
          %v2611 = vrot.slane %v2595, %v2610
          %v2612 = vrcp.pop %v2607
          %v2613 = vmul.f32 %v2600, %v2612
          %v2614 = vrcp.pop %v2611
          %v2615 = vmul.f32 %v2603, %v2614
          %v2618 = vlaneseq
          %v2619 = vand.u32 %v2618, 127
          %v2620 = vlaneseq
          %v2621 = vshrl.u32 %v2620, 7
          %v2622 = vsub.s32 %v2619, %v2621
          %v2623 = vrot.slane %v2613, %v2622
          %v2624 = vlaneseq
          %v2625 = vshrl.u32 %v2624, 7
          %v2626 = vsub.s32 %v2619, %v2625
          %v2627 = vrot.slane %v2615, %v2626
          %v2628 = vsel %vm1456, %v2627, %v2623
          %vm2630 = vcmask 9216
          %2631 = vst.msk [vmem:[%s288] sm:$0x3] %vm2630, %v2628
        $region52: #{tpu_custom_call.1} parent=35 // pred_fallthru
          _
        %s2632 = sand.u32 %s138, 1
        %s2633 = scalar_lea.sflag [#allocation6], %s2632
        %s2634 = sand.u32 %s138, 1
        %s2635 = smul.addr %s2634, 2
        %s2636 = scalar_lea.vmem [#allocation9], %s2635
        // Predicated region
        $region53: #{tpu_custom_call.1} parent=35 // pred_check
          %p2637 = pneg %p148
        $region54: #{tpu_custom_call.1} parent=35 // pred_check_branch
          %2639 = sbr.rel (%p2637) target = $region56
        $region55: #{tpu_custom_call.1} parent=35 // pred_region
          %s2641 = ssub.s32 32, 32
          %2642 = vsyncadd %s2633, %s2641
          %s2643 = smul.addr %s26, 32
          %s2644 = scalar_lea.hbm %s4, %s2643
          %s2646 = sshll.u32 %s2636, 4
          %s2647 = int_to_ptr.vmem [resolvable:$true] %s2646
          %2649 = dma.vmem_to_hbm [thread:$0]  %s2647, 32, %s2644, %s2633
        $region56: #{tpu_custom_call.1} parent=35 // pred_fallthru
          _
      $region36: #{tpu_custom_call.1} parent=5 // pred_fallthru
        _
      %p2650 = scmp.le.s32.totalorder 2, %s17
      // Predicated region
      $region57: #{tpu_custom_call.1} parent=5 // pred_check
        %p2651 = pneg %p2650
      $region58: #{tpu_custom_call.1} parent=5 // pred_check_branch
        %2653 = sbr.rel (%p2651) target = $region60
      $region59: #{tpu_custom_call.1} parent=5 // pred_region
        %s2654 = ssub.s32 %s17, 2
        // Predicated region
        $region61: #{tpu_custom_call.1} parent=59 // pred_check
          %p2655 = pneg %p154
        $region62: #{tpu_custom_call.1} parent=59 // pred_check_branch
          %2657 = sbr.rel (%p2655) target = $region64
        $region63: #{tpu_custom_call.1} parent=59 // pred_region
          %s2658 = sand.u32 %s139, 1
          %s2659 = scalar_lea.sflag [#allocation6], %s2658
          %s2660 = sand.u32 %s139, 1
          %s2661 = smul.addr %s2660, 2
          %s2662 = scalar_lea.vmem [#allocation9], %s2661
          %2663 = dma.done %s2659, 32
        $region64: #{tpu_custom_call.1} parent=59 // pred_fallthru
          _
      $region60: #{tpu_custom_call.1} parent=5 // pred_fallthru
        _
    $region6: #{tpu_custom_call.1} parent=1 // loop_footer
      %s21 = sadd.s32 1, %s17
    $region7: #{tpu_custom_call.1} parent=1 // loop_footer_branch
      %16 = sbr.rel target = $region3
    $region8: #{tpu_custom_call.1} parent=1 // loop_exit
      _
    %2664 = vsyncpa [#allocation5], 1
    %s2665 = scalar_lea.sflag [#allocation5], 1
    %2666 = vsyncpa %s2665, 1
    %2667 = vsyncpa [#allocation8], 1
    %2668 = vsyncpa [#allocation6], 1
    %s2669 = scalar_lea.sflag [#allocation6], 1
    %2670 = vsyncpa %s2669, 1

</llo_original>
